<compile_context>
chip_gen: v7x
topology: tpu7x:2x2x1
jax: 0.10.0
libtpu: 0.0.40
codegen_flags: <defaults>
</compile_context>

<pallas_src>
import functools

import jax
import jax.numpy as jnp
from jax.experimental import pallas as pl
from jax.experimental.pallas import tpu as pltpu


def _cpe_kernel(uid_ref, pid_ref, nid_ref,        # (1,TB,1), (1,TB,1), (1,TB,N) int32
                utab_ref, itab_ref, isq_ref,      # VMEM-resident tables
                out_ref,                          # (1, 1, 128) per-tile partial
                *, margin, batch, tile_b, n_neg, tiles_per_split):
    tile = pl.program_id(0) * tiles_per_split + pl.program_id(1)
    base = tile * tile_b

    uid = uid_ref[0]                               # (TB, 1) int32
    pid = pid_ref[0]                               # (TB, 1) int32
    nid = nid_ref[0]                               # (TB, N) int32

    utab = utab_ref[...]                           # (NU, D) f32
    itab = itab_ref[...]                           # (NI, D) f32
    num_users = utab.shape[0]
    num_items = itab.shape[0]

    # ---- user gather as a one-hot matmul (MXU) ------------------------------
    iota_u = jax.lax.broadcasted_iota(jnp.int32, (tile_b, num_users), 1)
    onehot_u = (iota_u == uid).astype(jnp.float32)                    # (TB, NU)
    u = jnp.dot(onehot_u, utab, preferred_element_type=jnp.float32)   # (TB, D)

    # ---- relative squared distance to every item (MXU + VPU) ----------------
    #   rel[b, j] = ||item_j||^2 - 2 u_b . item_j
    #             = ||u_b - item_j||^2 - ||u_b||^2   (||u_b||^2 cancels in delta)
    scores = jax.lax.dot_general(u, itab, (((1,), (1,)), ((), ())),
                                 preferred_element_type=jnp.float32)  # (TB, NI)
    rel = isq_ref[...] - 2.0 * scores                                 # (TB, NI)

    iota_i = jax.lax.broadcasted_iota(jnp.int32, (tile_b, num_items), 1)

    # positive distance (relative): exactly one column matches per row
    pos_rel = jnp.sum(jnp.where(iota_i == pid, rel, 0.0),
                      axis=-1, keepdims=True)                         # (TB, 1)

    # min over the N sampled negatives
    min_neg = jnp.full((tile_b, 1), jnp.inf, dtype=jnp.float32)
    for k in range(n_neg):                                            # static loop
        sel_k = iota_i == nid[:, k:k + 1]
        d_k = jnp.min(jnp.where(sel_k, rel, jnp.inf),
                      axis=-1, keepdims=True)                         # (TB, 1)
        min_neg = jnp.minimum(min_neg, d_k)

    delta = min_neg - pos_rel                                         # (TB, 1)
    # hinge(delta - m).sum() + hinge(m - delta).sum() == |delta - m|.sum()
    contrib = jnp.abs(delta - margin)

    # mask out rows that were added by batch padding
    rows = base + jax.lax.broadcasted_iota(jnp.int32, (tile_b, 1), 0)
    contrib = jnp.where(rows < batch, contrib, 0.0)

    # lane-dense store of the per-tile partial (read back lane 0 in JAX)
    out_ref[...] = jnp.zeros(out_ref.shape, jnp.float32) + jnp.sum(contrib)


def cpe_forward(user_table, item_table, user_ids, pos_ids, neg_ids,
                margin=0.5, tile_b=64):
    """Equivalent of CPE.forward with cov_loss_reg == 0: returns scalar loss."""
    B = user_ids.shape[0]
    N = neg_ids.shape[1]
    NU, D = user_table.shape
    NI, D2 = item_table.shape
    assert D == D2

    user_table = user_table.astype(jnp.float32)
    item_table = item_table.astype(jnp.float32)
    item_sq = jnp.sum(jnp.square(item_table), axis=-1).reshape(1, NI)

    table_bytes = (user_table.size + item_table.size) * 4
    # TODO(synk): fall back to an HBM async-copy gather path for huge tables.
    assert table_bytes <= 6 * 1024 * 1024, "embedding tables too large for VMEM-resident path"

    # ---- batch tiling: multiples of 8, pad + mask instead of gcd fallback ----
    tile_b = max(8, (int(tile_b) // 8) * 8)
    b_ceil8 = ((B + 7) // 8) * 8
    if tile_b > b_ceil8:
        tile_b = b_ceil8
    num_tiles = -(-B // tile_b)
    b_pad = num_tiles * tile_b
    pad = b_pad - B

    uid = jnp.pad(user_ids.astype(jnp.int32), (0, pad)).reshape(num_tiles, tile_b, 1)
    pid = jnp.pad(pos_ids.astype(jnp.int32), (0, pad)).reshape(num_tiles, tile_b, 1)
    nid = jnp.pad(neg_ids.astype(jnp.int32), ((0, pad), (0, 0))).reshape(num_tiles, tile_b, N)

    # ---- grid: (split, tiles_per_split); split=2 feeds both v7x TensorCores --
    split = 2 if (num_tiles >= 2 and num_tiles % 2 == 0) else 1
    tps = num_tiles // split

    kernel = functools.partial(_cpe_kernel, margin=float(margin), batch=B,
                               tile_b=tile_b, n_neg=N, tiles_per_split=tps)

    def id_map(c, t):
        return (c * tps + t, 0, 0)

    grid_spec = pltpu.PrefetchScalarGridSpec(
        num_scalar_prefetch=0,
        grid=(split, tps),
        in_specs=[
            pl.BlockSpec((1, tile_b, 1), id_map),            # user ids
            pl.BlockSpec((1, tile_b, 1), id_map),            # pos ids
            pl.BlockSpec((1, tile_b, N), id_map),            # neg ids
            pl.BlockSpec((NU, D), lambda c, t: (0, 0)),      # user table (resident)
            pl.BlockSpec((NI, D), lambda c, t: (0, 0)),      # item table (resident)
            pl.BlockSpec((1, NI), lambda c, t: (0, 0)),      # item row norms (resident)
        ],
        out_specs=pl.BlockSpec((1, 1, 128), id_map),
    )

    vmem_limit = int(min(64 * 1024 * 1024,
                         max(8 * 1024 * 1024, 4 * table_bytes + 4 * 1024 * 1024)))

    partials = pl.pallas_call(
        kernel,
        out_shape=jax.ShapeDtypeStruct((num_tiles, 1, 128), jnp.float32),
        grid_spec=grid_spec,
        compiler_params=pltpu.CompilerParams(
            dimension_semantics=("parallel", "arbitrary"),
            vmem_limit_bytes=vmem_limit,
        ),
    )(uid, pid, nid, user_table, item_table, item_sq)

    return jnp.sum(partials[:, 0, 0])


def _reference_loss(user_table, item_table, user_ids, pos_ids, neg_ids,
                    margin=0.5):
    u = jnp.take(user_table, user_ids, axis=0)
    p = jnp.take(item_table, pos_ids, axis=0)
    n = jnp.take(item_table, neg_ids, axis=0)
    pos_d = jnp.sum(jnp.square(u - p), axis=-1)
    neg_d = jnp.sum(jnp.square(u[:, None, :] - n), axis=-1)
    min_neg = jnp.min(neg_d, axis=-1)
    delta = min_neg - pos_d
    return (jnp.sum(jnp.maximum(delta - margin, 0.0))
            + jnp.sum(jnp.maximum(margin - delta, 0.0)))


if __name__ == "__main__":
    # Small synthetic setup consistent with the module's __init__ shapes
    # (dim kept lane-dense = 128; module default is 256).
    num_users, num_items, dim = 64, 128, 128
    batch, num_negs = 72, 8
    margin = 0.5

    key = jax.random.PRNGKey(0)
    k_u, k_i, k_uid, k_pid, k_nid = jax.random.split(key, 5)

    # nn.init.normal_(user_embeddings.weight, mean=0, std=0.01)
    user_table = 0.01 * jax.random.normal(k_u, (num_users, dim), jnp.float32)
    # nn.init.normal_(item_embeddings.weight, mean=0, std=1/sqrt(dim))
    item_table = (1.0 / dim ** 0.5) * jax.random.normal(
        k_i, (num_items, dim), jnp.float32)

    user_ids = jax.random.randint(k_uid, (batch,), 0, num_users)
    pos_ids = jax.random.randint(k_pid, (batch,), 0, num_items)
    neg_ids = jax.random.randint(k_nid, (batch, num_negs), 0, num_items)

    loss = cpe_forward(user_table, item_table, user_ids, pos_ids, neg_ids,
                       margin=margin, tile_b=64)
    jax.block_until_ready(loss)

    ref = _reference_loss(user_table, item_table, user_ids, pos_ids, neg_ids,
                          margin=margin)
    assert jnp.allclose(loss, ref, rtol=1e-4, atol=1e-3), (loss, ref)

    print("KERNEL_OK")
</pallas_src>

<mosaic_0001>
module attributes {stable_mosaic.version = 11 : i64} {
  func.func @_cpe_kernel(%arg0: i32, %arg1: i32, %arg2: memref<1x64x1xi32, #tpu.memory_space<vmem>>, %arg3: memref<1x64x1xi32, #tpu.memory_space<vmem>>, %arg4: memref<1x64x8xi32, #tpu.memory_space<vmem>>, %arg5: memref<64x128xf32, #tpu.memory_space<vmem>>, %arg6: memref<128x128xf32, #tpu.memory_space<vmem>>, %arg7: memref<1x128xf32, #tpu.memory_space<vmem>>, %arg8: memref<1x1x128xf32, #tpu.memory_space<vmem>>) attributes {dimension_semantics = [#tpu.dimension_semantics<parallel>, #tpu.dimension_semantics<arbitrary>], iteration_bounds = array<i64: 2, 1>, scalar_prefetch = 0 : i64, scratch_operands = 0 : i64, tpu.core_type = #tpu.core_type<tc>, window_params = [{transform_indices = @transform_0, window_bounds = array<i64: 1, 64, 1>}, {transform_indices = @transform_1, window_bounds = array<i64: 1, 64, 1>}, {transform_indices = @transform_2, window_bounds = array<i64: 1, 64, 8>}, {pipeline_mode = #tpu.pipeline_mode<synchronous>, transform_indices = @transform_3, window_bounds = array<i64: 64, 128>}, {pipeline_mode = #tpu.pipeline_mode<synchronous>, transform_indices = @transform_4, window_bounds = array<i64: 128, 128>}, {pipeline_mode = #tpu.pipeline_mode<synchronous>, transform_indices = @transform_5, window_bounds = array<i64: 1, 128>}, {transform_indices = @transform_6, window_bounds = array<i64: 1, 1, 128>}]} {
    %c1_i32 = arith.constant 1 : i32
    %0 = arith.muli %arg0, %c1_i32 : i32
    %1 = arith.addi %0, %arg1 : i32
    %c64_i32 = arith.constant 64 : i32
    %2 = arith.muli %1, %c64_i32 : i32
    %c0 = arith.constant 0 : index
    %c0_0 = arith.constant 0 : index
    %c0_1 = arith.constant 0 : index
    %3 = vector.load %arg2[%c0, %c0_0, %c0_1] : memref<1x64x1xi32, #tpu.memory_space<vmem>>, vector<1x64x1xi32>
    %4 = vector.shape_cast %3 : vector<1x64x1xi32> to vector<64x1xi32>
    %c0_2 = arith.constant 0 : index
    %c0_3 = arith.constant 0 : index
    %c0_4 = arith.constant 0 : index
    %5 = vector.load %arg3[%c0_2, %c0_3, %c0_4] : memref<1x64x1xi32, #tpu.memory_space<vmem>>, vector<1x64x1xi32>
    %6 = vector.shape_cast %5 : vector<1x64x1xi32> to vector<64x1xi32>
    %c0_5 = arith.constant 0 : index
    %c0_6 = arith.constant 0 : index
    %c0_7 = arith.constant 0 : index
    %7 = vector.load %arg4[%c0_5, %c0_6, %c0_7] : memref<1x64x8xi32, #tpu.memory_space<vmem>>, vector<1x64x8xi32>
    %8 = vector.shape_cast %7 : vector<1x64x8xi32> to vector<64x8xi32>
    %c0_8 = arith.constant 0 : index
    %c0_9 = arith.constant 0 : index
    %9 = vector.load %arg5[%c0_8, %c0_9] : memref<64x128xf32, #tpu.memory_space<vmem>>, vector<64x128xf32>
    %c0_10 = arith.constant 0 : index
    %c0_11 = arith.constant 0 : index
    %10 = vector.load %arg6[%c0_10, %c0_11] : memref<128x128xf32, #tpu.memory_space<vmem>>, vector<128x128xf32>
    %11 = tpu.iota {dimensions = array<i32: 1>} : vector<64x64xi32>
    %12 = vector.broadcast %4 : vector<64x1xi32> to vector<64x64xi32>
    %13 = arith.cmpi eq, %11, %12 : vector<64x64xi32>
    %14 = arith.extui %13 : vector<64x64xi1> to vector<64x64xi32>
    %15 = arith.sitofp %14 : vector<64x64xi32> to vector<64x64xf32>
    %cst = arith.constant dense<0.000000e+00> : vector<64x128xf32>
    %16 = tpu.matmul %15, %9, %cst {dimension_numbers = #tpu.dot_dimension_numbers<[1], [0], [0], [1], [0, 0, 1, 1], [], []>} : vector<64x64xf32>, vector<64x128xf32>, vector<64x128xf32> -> vector<64x128xf32>
    %cst_12 = arith.constant dense<0.000000e+00> : vector<64x128xf32>
    %17 = tpu.matmul %16, %10, %cst_12 {dimension_numbers = #tpu.dot_dimension_numbers<[1], [1], [0], [0], [0, 0, 1, 0], [], []>} : vector<64x128xf32>, vector<128x128xf32>, vector<64x128xf32> -> vector<64x128xf32>
    %c0_13 = arith.constant 0 : index
    %c0_14 = arith.constant 0 : index
    %18 = vector.load %arg7[%c0_13, %c0_14] : memref<1x128xf32, #tpu.memory_space<vmem>>, vector<1x128xf32>
    %cst_15 = arith.constant 2.000000e+00 : f32
    %19 = vector.broadcast %cst_15 : f32 to vector<64x128xf32>
    %20 = arith.mulf %19, %17 : vector<64x128xf32>
    %21 = vector.broadcast %18 : vector<1x128xf32> to vector<64x128xf32>
    %22 = arith.subf %21, %20 : vector<64x128xf32>
    %23 = tpu.iota {dimensions = array<i32: 1>} : vector<64x128xi32>
    %24 = vector.broadcast %6 : vector<64x1xi32> to vector<64x128xi32>
    %25 = arith.cmpi eq, %23, %24 : vector<64x128xi32>
    %cst_16 = arith.constant 0.000000e+00 : f32
    %26 = vector.broadcast %cst_16 : f32 to vector<64x128xf32>
    %27 = arith.select %25, %22, %26 : vector<64x128xi1>, vector<64x128xf32>
    %cst_17 = arith.constant dense<0.000000e+00> : vector<64xf32>
    %28 = vector.multi_reduction <add>, %27, %cst_17 [1] : vector<64x128xf32> to vector<64xf32>
    %29 = vector.shape_cast %28 : vector<64xf32> to vector<64x1xf32>
    %cst_18 = arith.constant 0x7F800000 : f32
    %30 = vector.broadcast %cst_18 : f32 to vector<64x1xf32>
    %31 = vector.extract_strided_slice %8 {offsets = [0, 0], sizes = [64, 1], strides = [1, 1]} : vector<64x8xi32> to vector<64x1xi32>
    %32 = vector.broadcast %31 : vector<64x1xi32> to vector<64x128xi32>
    %33 = arith.cmpi eq, %23, %32 : vector<64x128xi32>
    %cst_19 = arith.constant 0x7F800000 : f32
    %34 = vector.broadcast %cst_19 : f32 to vector<64x128xf32>
    %35 = arith.select %33, %22, %34 : vector<64x128xi1>, vector<64x128xf32>
    %cst_20 = arith.constant dense<0x7F800000> : vector<64xf32>
    %36 = vector.multi_reduction <minimumf>, %35, %cst_20 [1] : vector<64x128xf32> to vector<64xf32>
    %37 = vector.shape_cast %36 : vector<64xf32> to vector<64x1xf32>
    %38 = arith.minimumf %30, %37 : vector<64x1xf32>
    %39 = vector.extract_strided_slice %8 {offsets = [0, 1], sizes = [64, 1], strides = [1, 1]} : vector<64x8xi32> to vector<64x1xi32>
    %40 = vector.broadcast %39 : vector<64x1xi32> to vector<64x128xi32>
    %41 = arith.cmpi eq, %23, %40 : vector<64x128xi32>
    %cst_21 = arith.constant 0x7F800000 : f32
    %42 = vector.broadcast %cst_21 : f32 to vector<64x128xf32>
    %43 = arith.select %41, %22, %42 : vector<64x128xi1>, vector<64x128xf32>
    %cst_22 = arith.constant dense<0x7F800000> : vector<64xf32>
    %44 = vector.multi_reduction <minimumf>, %43, %cst_22 [1] : vector<64x128xf32> to vector<64xf32>
    %45 = vector.shape_cast %44 : vector<64xf32> to vector<64x1xf32>
    %46 = arith.minimumf %38, %45 : vector<64x1xf32>
    %47 = vector.extract_strided_slice %8 {offsets = [0, 2], sizes = [64, 1], strides = [1, 1]} : vector<64x8xi32> to vector<64x1xi32>
    %48 = vector.broadcast %47 : vector<64x1xi32> to vector<64x128xi32>
    %49 = arith.cmpi eq, %23, %48 : vector<64x128xi32>
    %cst_23 = arith.constant 0x7F800000 : f32
    %50 = vector.broadcast %cst_23 : f32 to vector<64x128xf32>
    %51 = arith.select %49, %22, %50 : vector<64x128xi1>, vector<64x128xf32>
    %cst_24 = arith.constant dense<0x7F800000> : vector<64xf32>
    %52 = vector.multi_reduction <minimumf>, %51, %cst_24 [1] : vector<64x128xf32> to vector<64xf32>
    %53 = vector.shape_cast %52 : vector<64xf32> to vector<64x1xf32>
    %54 = arith.minimumf %46, %53 : vector<64x1xf32>
    %55 = vector.extract_strided_slice %8 {offsets = [0, 3], sizes = [64, 1], strides = [1, 1]} : vector<64x8xi32> to vector<64x1xi32>
    %56 = vector.broadcast %55 : vector<64x1xi32> to vector<64x128xi32>
    %57 = arith.cmpi eq, %23, %56 : vector<64x128xi32>
    %cst_25 = arith.constant 0x7F800000 : f32
    %58 = vector.broadcast %cst_25 : f32 to vector<64x128xf32>
    %59 = arith.select %57, %22, %58 : vector<64x128xi1>, vector<64x128xf32>
    %cst_26 = arith.constant dense<0x7F800000> : vector<64xf32>
    %60 = vector.multi_reduction <minimumf>, %59, %cst_26 [1] : vector<64x128xf32> to vector<64xf32>
    %61 = vector.shape_cast %60 : vector<64xf32> to vector<64x1xf32>
    %62 = arith.minimumf %54, %61 : vector<64x1xf32>
    %63 = vector.extract_strided_slice %8 {offsets = [0, 4], sizes = [64, 1], strides = [1, 1]} : vector<64x8xi32> to vector<64x1xi32>
    %64 = vector.broadcast %63 : vector<64x1xi32> to vector<64x128xi32>
    %65 = arith.cmpi eq, %23, %64 : vector<64x128xi32>
    %cst_27 = arith.constant 0x7F800000 : f32
    %66 = vector.broadcast %cst_27 : f32 to vector<64x128xf32>
    %67 = arith.select %65, %22, %66 : vector<64x128xi1>, vector<64x128xf32>
    %cst_28 = arith.constant dense<0x7F800000> : vector<64xf32>
    %68 = vector.multi_reduction <minimumf>, %67, %cst_28 [1] : vector<64x128xf32> to vector<64xf32>
    %69 = vector.shape_cast %68 : vector<64xf32> to vector<64x1xf32>
    %70 = arith.minimumf %62, %69 : vector<64x1xf32>
    %71 = vector.extract_strided_slice %8 {offsets = [0, 5], sizes = [64, 1], strides = [1, 1]} : vector<64x8xi32> to vector<64x1xi32>
    %72 = vector.broadcast %71 : vector<64x1xi32> to vector<64x128xi32>
    %73 = arith.cmpi eq, %23, %72 : vector<64x128xi32>
    %cst_29 = arith.constant 0x7F800000 : f32
    %74 = vector.broadcast %cst_29 : f32 to vector<64x128xf32>
    %75 = arith.select %73, %22, %74 : vector<64x128xi1>, vector<64x128xf32>
    %cst_30 = arith.constant dense<0x7F800000> : vector<64xf32>
    %76 = vector.multi_reduction <minimumf>, %75, %cst_30 [1] : vector<64x128xf32> to vector<64xf32>
    %77 = vector.shape_cast %76 : vector<64xf32> to vector<64x1xf32>
    %78 = arith.minimumf %70, %77 : vector<64x1xf32>
    %79 = vector.extract_strided_slice %8 {offsets = [0, 6], sizes = [64, 1], strides = [1, 1]} : vector<64x8xi32> to vector<64x1xi32>
    %80 = vector.broadcast %79 : vector<64x1xi32> to vector<64x128xi32>
    %81 = arith.cmpi eq, %23, %80 : vector<64x128xi32>
    %cst_31 = arith.constant 0x7F800000 : f32
    %82 = vector.broadcast %cst_31 : f32 to vector<64x128xf32>
    %83 = arith.select %81, %22, %82 : vector<64x128xi1>, vector<64x128xf32>
    %cst_32 = arith.constant dense<0x7F800000> : vector<64xf32>
    %84 = vector.multi_reduction <minimumf>, %83, %cst_32 [1] : vector<64x128xf32> to vector<64xf32>
    %85 = vector.shape_cast %84 : vector<64xf32> to vector<64x1xf32>
    %86 = arith.minimumf %78, %85 : vector<64x1xf32>
    %87 = vector.extract_strided_slice %8 {offsets = [0, 7], sizes = [64, 1], strides = [1, 1]} : vector<64x8xi32> to vector<64x1xi32>
    %88 = vector.broadcast %87 : vector<64x1xi32> to vector<64x128xi32>
    %89 = arith.cmpi eq, %23, %88 : vector<64x128xi32>
    %cst_33 = arith.constant 0x7F800000 : f32
    %90 = vector.broadcast %cst_33 : f32 to vector<64x128xf32>
    %91 = arith.select %89, %22, %90 : vector<64x128xi1>, vector<64x128xf32>
    %cst_34 = arith.constant dense<0x7F800000> : vector<64xf32>
    %92 = vector.multi_reduction <minimumf>, %91, %cst_34 [1] : vector<64x128xf32> to vector<64xf32>
    %93 = vector.shape_cast %92 : vector<64xf32> to vector<64x1xf32>
    %94 = arith.minimumf %86, %93 : vector<64x1xf32>
    %95 = arith.subf %94, %29 : vector<64x1xf32>
    %cst_35 = arith.constant 5.000000e-01 : f32
    %96 = vector.broadcast %cst_35 : f32 to vector<64x1xf32>
    %97 = arith.subf %95, %96 : vector<64x1xf32>
    %98 = math.absf %97 : vector<64x1xf32>
    %99 = tpu.iota {dimensions = array<i32: 0>} : vector<64x1xi32>
    %100 = vector.broadcast %2 : i32 to vector<64x1xi32>
    %101 = arith.addi %100, %99 : vector<64x1xi32>
    %c72_i32 = arith.constant 72 : i32
    %102 = vector.broadcast %c72_i32 : i32 to vector<64x1xi32>
    %103 = arith.cmpi slt, %101, %102 : vector<64x1xi32>
    %cst_36 = arith.constant 0.000000e+00 : f32
    %104 = vector.broadcast %cst_36 : f32 to vector<64x1xf32>
    %105 = arith.select %103, %98, %104 : vector<64x1xi1>, vector<64x1xf32>
    %cst_37 = arith.constant 0.000000e+00 : f32
    %106 = vector.broadcast %cst_37 : f32 to vector<1x1x128xf32>
    %107 = vector.shape_cast %105 : vector<64x1xf32> to vector<1x64x1xf32>
    %cst_38 = arith.constant dense<0.000000e+00> : vector<1xf32>
    %108 = vector.multi_reduction <add>, %107, %cst_38 [1, 2] : vector<1x64x1xf32> to vector<1xf32>
    %109 = vector.shape_cast %108 : vector<1xf32> to vector<1x1x1xf32>
    %110 = vector.extract %109[0, 0, 0] : f32 from vector<1x1x1xf32>
    %111 = vector.broadcast %110 : f32 to vector<1x1x128xf32>
    %112 = arith.addf %106, %111 : vector<1x1x128xf32>
    %c0_39 = arith.constant 0 : index
    %c0_40 = arith.constant 0 : index
    %c0_41 = arith.constant 0 : index
    %113 = vector.load %arg8[%c0_39, %c0_40, %c0_41] : memref<1x1x128xf32, #tpu.memory_space<vmem>>, vector<1x1x128xf32>
    tpu.vector_store %arg8[%c0_39, %c0_40, %c0_41], %112 {strides = array<i32>} : memref<1x1x128xf32, #tpu.memory_space<vmem>>, vector<1x1x128xf32>,
    return
  }
  func.func @transform_0(%arg0: i32, %arg1: i32) -> (i32, i32, i32) {
    %c1_i32 = arith.constant 1 : i32
    %0 = arith.muli %arg0, %c1_i32 : i32
    %1 = arith.addi %0, %arg1 : i32
    %c0_i32 = arith.constant 0 : i32
    %c0_i32_0 = arith.constant 0 : i32
    %c0_i32_1 = arith.constant 0 : i32
    return %1, %c0_i32, %c0_i32_0 : i32, i32, i32
  }
  func.func @transform_1(%arg0: i32, %arg1: i32) -> (i32, i32, i32) {
    %c1_i32 = arith.constant 1 : i32
    %0 = arith.muli %arg0, %c1_i32 : i32
    %1 = arith.addi %0, %arg1 : i32
    %c0_i32 = arith.constant 0 : i32
    %c0_i32_0 = arith.constant 0 : i32
    %c0_i32_1 = arith.constant 0 : i32
    return %1, %c0_i32, %c0_i32_0 : i32, i32, i32
  }
  func.func @transform_2(%arg0: i32, %arg1: i32) -> (i32, i32, i32) {
    %c1_i32 = arith.constant 1 : i32
    %0 = arith.muli %arg0, %c1_i32 : i32
    %1 = arith.addi %0, %arg1 : i32
    %c0_i32 = arith.constant 0 : i32
    %c0_i32_0 = arith.constant 0 : i32
    %c0_i32_1 = arith.constant 0 : i32
    return %1, %c0_i32, %c0_i32_0 : i32, i32, i32
  }
  func.func @transform_3(%arg0: i32, %arg1: i32) -> (i32, i32) {
    %c0_i32 = arith.constant 0 : i32
    %c0_i32_0 = arith.constant 0 : i32
    %c0_i32_1 = arith.constant 0 : i32
    return %c0_i32, %c0_i32_0 : i32, i32
  }
  func.func @transform_4(%arg0: i32, %arg1: i32) -> (i32, i32) {
    %c0_i32 = arith.constant 0 : i32
    %c0_i32_0 = arith.constant 0 : i32
    %c0_i32_1 = arith.constant 0 : i32
    return %c0_i32, %c0_i32_0 : i32, i32
  }
  func.func @transform_5(%arg0: i32, %arg1: i32) -> (i32, i32) {
    %c0_i32 = arith.constant 0 : i32
    %c0_i32_0 = arith.constant 0 : i32
    %c0_i32_1 = arith.constant 0 : i32
    return %c0_i32, %c0_i32_0 : i32, i32
  }
  func.func @transform_6(%arg0: i32, %arg1: i32) -> (i32, i32, i32) {
    %c1_i32 = arith.constant 1 : i32
    %0 = arith.muli %arg0, %c1_i32 : i32
    %1 = arith.addi %0, %arg1 : i32
    %c0_i32 = arith.constant 0 : i32
    %c0_i32_0 = arith.constant 0 : i32
    %c0_i32_1 = arith.constant 0 : i32
    return %1, %c0_i32, %c0_i32_0 : i32, i32, i32
  }
}

</mosaic_0001>

<llo_original>
// kernel: tpu_custom_call.1
$region0: #{tpu_custom_call.1}
  #allocation0 [shape = 'u32[]', space=smem, size = 0x4, offset = 0x4, fixed_abs, tag = 'smem constant byte address 0x4 - core index']
  #allocation1 [shape = 'u32[144,128]{1,0:T(1,128)}', space=vmem, size = 0x12000, scoped, tag = 'internal scratch']
  %s0 = inlined_call_operand.vmem [shape: s32[2,64,1], index: 0, kind: input, shape index: {}]
  %s1 = inlined_call_operand.vmem [shape: s32[2,64,1], index: 1, kind: input, shape index: {}]
  %s2 = inlined_call_operand.vmem [shape: s32[2,64,8], index: 2, kind: input, shape index: {}]
  %s3 = inlined_call_operand.vmem [shape: f32[64,128], index: 3, kind: input, shape index: {}]
  %s4 = inlined_call_operand.vmem [shape: f32[128,128], index: 4, kind: input, shape index: {}]
  %s5 = inlined_call_operand.vmem [shape: f32[1,128], index: 5, kind: input, shape index: {}]
  %s6 = inlined_call_operand.hbm [shape: f32[2,1,128], index: 6, kind: output, shape index: {}]
  %s7 = sld [smem:[#allocation0]]
  $region57: #{tpu_custom_call.1} parent=0
    _
  %s9 = ssub.s32 1, %s7
  %s10 = scalar_select 0, %s9, %s7
  $region1: #{tpu_custom_call.1} parent=0
    #allocation2 [shape = 'u8[1024]{0}', space=vmem, size = 0x400, scoped, tag = 'output window, operand 0']
    #allocation3 [shape = 's32[2]{0}', space=sflag, size = 0x8, scoped, tag = 'scoped memory for tpu_custom_call.1']
    %11 = vsyncpa [#allocation3], 0
    %s12 = scalar_lea.sflag [#allocation3], 1
    %13 = vsyncpa %s12, 0
    loop: start=0, step=1, limit=4
    $region2: #{tpu_custom_call.1} parent=1 // loop_pre_header
      _
    $region3: #{tpu_custom_call.1} parent=1 // loop_header
      %s15 = sphi 0, %s19
      %p16 = scmp.ge.s32.totalorder %s15, 4
      %s22 = sphi 0, %s34
      %s23 = sphi 0, %s30
      %s24 = sphi 0, %s22
      %s25 = sphi 0, %s23
      %s26 = sphi 0, %s24
      %s27 = sphi 0, %s25
      %s39 = sphi 0, %s41
      %s42 = sphi 0, %s39
      %s43 = sphi 0, %s42
      %s59 = sphi 0, %s43
      %s67 = sphi 0, %s69
      %s70 = sphi 0, %s67
      %s71 = sphi 0, %s70
      %s87 = sphi 0, %s71
      %s95 = sphi 0, %s97
      %s98 = sphi 0, %s95
      %s99 = sphi 0, %s98
      %s115 = sphi 0, %s99
      %s119 = sphi 0, %s119
      %s121 = sphi 0, %s119
      %s122 = sphi 0, %s121
      %s136 = sphi 0, %s122
      %s140 = sphi 0, %s140
      %s142 = sphi 0, %s140
      %s143 = sphi 0, %s142
      %s157 = sphi 0, %s143
      %s161 = sphi 0, %s161
      %s163 = sphi 0, %s161
      %s164 = sphi 0, %s163
      %s178 = sphi 0, %s164
      %s186 = sphi 0, %s188
      %s189 = sphi 0, %s186
      %s190 = sphi 0, %s189
      %s206 = sphi 0, %s190
    $region4: #{tpu_custom_call.1} parent=1 // loop_header_branch
      %18 = sbr.rel (%p16) target = $region8
    $region5: #{tpu_custom_call.1} parent=1 // loop_body
      %s20 = ssub.s32 %s15, 1
      %s21 = ssub.s32 %s15, 2
      %s28 = sadd.s32 1, %s23
      %p29 = scmp.ge.s32.totalorder %s28, 1
      %s30 = scalar_select %p29, 0, %s28
      %s31 = sadd.s32 1, %s22
      %s32 = scalar_select %p29, %s31, %s22
      %p33 = scmp.ge.s32.totalorder %s32, 2
      %s34 = scalar_select %p33, 0, %s32
      %s35 = sadd.s32 %s22, %s23
      %s36 = sadd.s32 %s34, %s30
      %s37 = ssub.s32 %s35, %s36
      %p38 = scmp.eq.s32.totalorder %s37, 0
      %s40 = sadd.s32 %s39, 1
      %s41 = scalar_select %p38, %s39, %s40
      %p44 = pneg %p38
      %p45 = scmp.eq.s32.totalorder %s15, 1
      %p46 = por %p44, %p45
      %p47 = scmp.ne.s32.totalorder %s39, %s42
      %p48 = scmp.eq.s32.totalorder %s15, 0
      %p49 = por %p47, %p48
      %p50 = scmp.ne.s32.totalorder %s39, %s42
      %p51 = scmp.eq.s32.totalorder %s20, 1
      %p52 = por %p50, %p51
      %p53 = scmp.ne.s32.totalorder %s42, %s43
      %p54 = scmp.eq.s32.totalorder %s20, 0
      %p55 = por %p53, %p54
      %p56 = scmp.ne.s32.totalorder %s42, %s43
      %p57 = scmp.eq.s32.totalorder %s21, 1
      %p58 = por %p56, %p57
      %p60 = scmp.ne.s32.totalorder %s43, %s59
      %p61 = scmp.eq.s32.totalorder %s21, 0
      %p62 = por %p60, %p61
      %s63 = sadd.s32 %s22, %s23
      %s64 = sadd.s32 %s34, %s30
      %s65 = ssub.s32 %s63, %s64
      %p66 = scmp.eq.s32.totalorder %s65, 0
      %s68 = sadd.s32 %s67, 1
      %s69 = scalar_select %p66, %s67, %s68
      %p72 = pneg %p66
      %p73 = scmp.eq.s32.totalorder %s15, 1
      %p74 = por %p72, %p73
      %p75 = scmp.ne.s32.totalorder %s67, %s70
      %p76 = scmp.eq.s32.totalorder %s15, 0
      %p77 = por %p75, %p76
      %p78 = scmp.ne.s32.totalorder %s67, %s70
      %p79 = scmp.eq.s32.totalorder %s20, 1
      %p80 = por %p78, %p79
      %p81 = scmp.ne.s32.totalorder %s70, %s71
      %p82 = scmp.eq.s32.totalorder %s20, 0
      %p83 = por %p81, %p82
      %p84 = scmp.ne.s32.totalorder %s70, %s71
      %p85 = scmp.eq.s32.totalorder %s21, 1
      %p86 = por %p84, %p85
      %p88 = scmp.ne.s32.totalorder %s71, %s87
      %p89 = scmp.eq.s32.totalorder %s21, 0
      %p90 = por %p88, %p89
      %s91 = sadd.s32 %s22, %s23
      %s92 = sadd.s32 %s34, %s30
      %s93 = ssub.s32 %s91, %s92
      %p94 = scmp.eq.s32.totalorder %s93, 0
      %s96 = sadd.s32 %s95, 1
      %s97 = scalar_select %p94, %s95, %s96
      %p100 = pneg %p94
      %p101 = scmp.eq.s32.totalorder %s15, 1
      %p102 = por %p100, %p101
      %p103 = scmp.ne.s32.totalorder %s95, %s98
      %p104 = scmp.eq.s32.totalorder %s15, 0
      %p105 = por %p103, %p104
      %p106 = scmp.ne.s32.totalorder %s95, %s98
      %p107 = scmp.eq.s32.totalorder %s20, 1
      %p108 = por %p106, %p107
      %p109 = scmp.ne.s32.totalorder %s98, %s99
      %p110 = scmp.eq.s32.totalorder %s20, 0
      %p111 = por %p109, %p110
      %p112 = scmp.ne.s32.totalorder %s98, %s99
      %p113 = scmp.eq.s32.totalorder %s21, 1
      %p114 = por %p112, %p113
      %p116 = scmp.ne.s32.totalorder %s99, %s115
      %p117 = scmp.eq.s32.totalorder %s21, 0
      %p118 = por %p116, %p117
      %s120 = sadd.s32 %s119, 1
      %p123 = scmp.eq.s32.totalorder %s15, 1
      %p124 = scmp.ne.s32.totalorder %s119, %s121
      %p125 = scmp.eq.s32.totalorder %s15, 0
      %p126 = por %p124, %p125
      %p127 = scmp.ne.s32.totalorder %s119, %s121
      %p128 = scmp.eq.s32.totalorder %s20, 1
      %p129 = por %p127, %p128
      %p130 = scmp.ne.s32.totalorder %s121, %s122
      %p131 = scmp.eq.s32.totalorder %s20, 0
      %p132 = por %p130, %p131
      %p133 = scmp.ne.s32.totalorder %s121, %s122
      %p134 = scmp.eq.s32.totalorder %s21, 1
      %p135 = por %p133, %p134
      %p137 = scmp.ne.s32.totalorder %s122, %s136
      %p138 = scmp.eq.s32.totalorder %s21, 0
      %p139 = por %p137, %p138
      %s141 = sadd.s32 %s140, 1
      %p144 = scmp.eq.s32.totalorder %s15, 1
      %p145 = scmp.ne.s32.totalorder %s140, %s142
      %p146 = scmp.eq.s32.totalorder %s15, 0
      %p147 = por %p145, %p146
      %p148 = scmp.ne.s32.totalorder %s140, %s142
      %p149 = scmp.eq.s32.totalorder %s20, 1
      %p150 = por %p148, %p149
      %p151 = scmp.ne.s32.totalorder %s142, %s143
      %p152 = scmp.eq.s32.totalorder %s20, 0
      %p153 = por %p151, %p152
      %p154 = scmp.ne.s32.totalorder %s142, %s143
      %p155 = scmp.eq.s32.totalorder %s21, 1
      %p156 = por %p154, %p155
      %p158 = scmp.ne.s32.totalorder %s143, %s157
      %p159 = scmp.eq.s32.totalorder %s21, 0
      %p160 = por %p158, %p159
      %s162 = sadd.s32 %s161, 1
      %p165 = scmp.eq.s32.totalorder %s15, 1
      %p166 = scmp.ne.s32.totalorder %s161, %s163
      %p167 = scmp.eq.s32.totalorder %s15, 0
      %p168 = por %p166, %p167
      %p169 = scmp.ne.s32.totalorder %s161, %s163
      %p170 = scmp.eq.s32.totalorder %s20, 1
      %p171 = por %p169, %p170
      %p172 = scmp.ne.s32.totalorder %s163, %s164
      %p173 = scmp.eq.s32.totalorder %s20, 0
      %p174 = por %p172, %p173
      %p175 = scmp.ne.s32.totalorder %s163, %s164
      %p176 = scmp.eq.s32.totalorder %s21, 1
      %p177 = por %p175, %p176
      %p179 = scmp.ne.s32.totalorder %s164, %s178
      %p180 = scmp.eq.s32.totalorder %s21, 0
      %p181 = por %p179, %p180
      %s182 = sadd.s32 %s22, %s23
      %s183 = sadd.s32 %s34, %s30
      %s184 = ssub.s32 %s182, %s183
      %p185 = scmp.eq.s32.totalorder %s184, 0
      %s187 = sadd.s32 %s186, 1
      %s188 = scalar_select %p185, %s186, %s187
      %p191 = pneg %p185
      %p192 = scmp.eq.s32.totalorder %s15, 1
      %p193 = por %p191, %p192
      %p194 = scmp.ne.s32.totalorder %s186, %s189
      %p195 = scmp.eq.s32.totalorder %s15, 0
      %p196 = por %p194, %p195
      %p197 = scmp.ne.s32.totalorder %s186, %s189
      %p198 = scmp.eq.s32.totalorder %s20, 1
      %p199 = por %p197, %p198
      %p200 = scmp.ne.s32.totalorder %s189, %s190
      %p201 = scmp.eq.s32.totalorder %s20, 0
      %p202 = por %p200, %p201
      %p203 = scmp.ne.s32.totalorder %s189, %s190
      %p204 = scmp.eq.s32.totalorder %s21, 1
      %p205 = por %p203, %p204
      %p207 = scmp.ne.s32.totalorder %s190, %s206
      %p208 = scmp.eq.s32.totalorder %s21, 0
      %p209 = por %p207, %p208
      %p210 = scmp.le.s32.totalorder 1, %s15
      %p211 = scmp.lt.s32.totalorder %s15, 3
      %p212 = pnand %p210, %p211
      %p213 = pneg %p212
      // Predicated region
      $region9: #{tpu_custom_call.1} parent=5 // pred_check
        _
      $region10: #{tpu_custom_call.1} parent=5 // pred_check_branch
        %215 = sbr.rel (%p212) target = $region12
      $region11: #{tpu_custom_call.1} parent=5 // pred_region
        %s216 = ssub.s32 %s15, 1
        // Predicated region
        $region13: #{tpu_custom_call.1} parent=11 // pred_check
          %p217 = pneg %p132
        $region14: #{tpu_custom_call.1} parent=11 // pred_check_branch
          %219 = sbr.rel (%p217) target = $region16
        $region15: #{tpu_custom_call.1} parent=11 // pred_region
          _
        $region16: #{tpu_custom_call.1} parent=11 // pred_fallthru
          _
        // Predicated region
        $region17: #{tpu_custom_call.1} parent=11 // pred_check
          %p220 = pneg %p153
        $region18: #{tpu_custom_call.1} parent=11 // pred_check_branch
          %222 = sbr.rel (%p220) target = $region20
        $region19: #{tpu_custom_call.1} parent=11 // pred_region
          _
        $region20: #{tpu_custom_call.1} parent=11 // pred_fallthru
          _
        // Predicated region
        $region21: #{tpu_custom_call.1} parent=11 // pred_check
          %p223 = pneg %p174
        $region22: #{tpu_custom_call.1} parent=11 // pred_check_branch
          %225 = sbr.rel (%p223) target = $region24
        $region23: #{tpu_custom_call.1} parent=11 // pred_region
          _
        $region24: #{tpu_custom_call.1} parent=11 // pred_fallthru
          _
      $region12: #{tpu_custom_call.1} parent=5 // pred_fallthru
        _
      %p226 = scmp.lt.s32.totalorder %s15, 2
      // Predicated region
      $region25: #{tpu_custom_call.1} parent=5 // pred_check
        %p227 = pneg %p226
      $region26: #{tpu_custom_call.1} parent=5 // pred_check_branch
        %229 = sbr.rel (%p227) target = $region28
      $region27: #{tpu_custom_call.1} parent=5 // pred_region
        // Predicated region
        $region29: #{tpu_custom_call.1} parent=27 // pred_check
          %p230 = pneg %p49
        $region30: #{tpu_custom_call.1} parent=27 // pred_check_branch
          %232 = sbr.rel (%p230) target = $region32
        $region31: #{tpu_custom_call.1} parent=27 // pred_region
          %s233 = sadd.s32 %s22, %s23
          %p234 = scmp.lt.s32.totalorder %s233, 1
          %s235 = scalar_select %p234, %s233, 1
          %s236 = smul.addr %s235, 8
          %s237 = smul.addr %s236, 8
          %s238 = scalar_lea.vmem %s0, %s237
          %s239 = sadd.s32 %s22, %s23
        $region32: #{tpu_custom_call.1} parent=27 // pred_fallthru
          _
        // Predicated region
        $region33: #{tpu_custom_call.1} parent=27 // pred_check
          %p240 = pneg %p77
        $region34: #{tpu_custom_call.1} parent=27 // pred_check_branch
          %242 = sbr.rel (%p240) target = $region36
        $region35: #{tpu_custom_call.1} parent=27 // pred_region
          %s243 = sadd.s32 %s22, %s23
          %p244 = scmp.lt.s32.totalorder %s243, 1
          %s245 = scalar_select %p244, %s243, 1
          %s246 = smul.addr %s245, 8
          %s247 = smul.addr %s246, 8
          %s248 = scalar_lea.vmem %s1, %s247
          %s249 = sadd.s32 %s22, %s23
        $region36: #{tpu_custom_call.1} parent=27 // pred_fallthru
          _
        // Predicated region
        $region37: #{tpu_custom_call.1} parent=27 // pred_check
          %p250 = pneg %p105
        $region38: #{tpu_custom_call.1} parent=27 // pred_check_branch
          %252 = sbr.rel (%p250) target = $region40
        $region39: #{tpu_custom_call.1} parent=27 // pred_region
          %s253 = sadd.s32 %s22, %s23
          %p254 = scmp.lt.s32.totalorder %s253, 1
          %s255 = scalar_select %p254, %s253, 1
          %s256 = smul.addr %s255, 8
          %s257 = smul.addr %s256, 8
          %s258 = scalar_lea.vmem %s2, %s257
          %s259 = sadd.s32 %s22, %s23
        $region40: #{tpu_custom_call.1} parent=27 // pred_fallthru
          _
      $region28: #{tpu_custom_call.1} parent=5 // pred_fallthru
        _
      %p260 = scmp.le.s32.totalorder 1, %s15
      %p261 = scmp.lt.s32.totalorder %s15, 3
      %p262 = pnand %p260, %p261
      %p263 = pneg %p262
      // Predicated region
      $region41: #{tpu_custom_call.1} parent=5 // pred_check
        _
      $region42: #{tpu_custom_call.1} parent=5 // pred_check_branch
        %265 = sbr.rel (%p262) target = $region44
      $region43: #{tpu_custom_call.1} parent=5 // pred_region
        %s266 = ssub.s32 %s15, 1
        %s267 = sadd.s32 %s24, %s25
        %p268 = scmp.lt.s32.totalorder %s267, 1
        %s269 = scalar_select %p268, %s267, 1
        %s270 = smul.addr %s269, 8
        %s271 = smul.addr %s270, 8
        %s272 = scalar_lea.vmem %s0, %s271
        %p273 = pneg %p55
        %p274 = pneg %p52
        %s275 = sadd.s32 %s24, %s25
        %p276 = scmp.lt.s32.totalorder %s275, 1
        %s277 = scalar_select %p276, %s275, 1
        %s278 = smul.addr %s277, 8
        %s279 = smul.addr %s278, 8
        %s280 = scalar_lea.vmem %s1, %s279
        %p281 = pneg %p83
        %p282 = pneg %p80
        %s283 = sadd.s32 %s24, %s25
        %p284 = scmp.lt.s32.totalorder %s283, 1
        %s285 = scalar_select %p284, %s283, 1
        %s286 = smul.addr %s285, 8
        %s287 = smul.addr %s286, 8
        %s288 = scalar_lea.vmem %s2, %s287
        %p289 = pneg %p111
        %p290 = pneg %p108
        %p291 = pneg %p132
        %p292 = pneg %p129
        %p293 = pneg %p153
        %p294 = pneg %p150
        %p295 = pneg %p174
        %p296 = pneg %p171
        %p297 = pneg %p202
        %p298 = pneg %p199
        %s299 = sand.u32 %s189, 1
        %s300 = scalar_lea.sflag [#allocation3], %s299
        %s301 = sand.u32 %s189, 1
        %s302 = scalar_lea.vmem [#allocation2], %s301
        %s303 = sadd.s32 %s24, %s25
        %p304 = scmp.lt.s32.totalorder %s303, 1
        %s305 = scalar_select %p304, %s303, 1
        %s306 = smul.addr %s305, 8
        %s307 = smul.addr %s306, 8
        %s308 = scalar_lea.vmem %s0, %s307
        %s309 = sadd.s32 %s24, %s25
        %s310 = sadd.s32 %s24, %s25
        %p311 = scmp.lt.s32.totalorder %s310, 1
        %s312 = scalar_select %p311, %s310, 1
        %s313 = smul.addr %s312, 8
        %s314 = smul.addr %s313, 8
        %s315 = scalar_lea.vmem %s1, %s314
        %s316 = sadd.s32 %s24, %s25
        %s317 = sadd.s32 %s24, %s25
        %p318 = scmp.lt.s32.totalorder %s317, 1
        %s319 = scalar_select %p318, %s317, 1
        %s320 = smul.addr %s319, 8
        %s321 = smul.addr %s320, 8
        %s322 = scalar_lea.vmem %s2, %s321
        %s323 = sadd.s32 %s24, %s25
        %s324 = sadd.s32 %s24, %s25
        %s325 = sadd.s32 %s24, %s25
        %s326 = smul.u32 %s325, 64
        %v327 = vld [vmem:[%s308] sm:$0xff]
        %v328 = vld [vmem:[%s308 + $0x8] sm:$0xff]
        %v329 = vld [vmem:[%s308 + $0x10] sm:$0xff]
        %v330 = vld [vmem:[%s308 + $0x18] sm:$0xff]
        %v331 = vld [vmem:[%s308 + $0x20] sm:$0xff]
        %v332 = vld [vmem:[%s308 + $0x28] sm:$0xff]
        %v333 = vld [vmem:[%s308 + $0x30] sm:$0xff]
        %v334 = vld [vmem:[%s308 + $0x38] sm:$0xff]
        %v335 = vld [vmem:[%s315] sm:$0xff]
        %v336 = vld [vmem:[%s315 + $0x8] sm:$0xff]
        %v337 = vld [vmem:[%s315 + $0x10] sm:$0xff]
        %v338 = vld [vmem:[%s315 + $0x18] sm:$0xff]
        %v339 = vld [vmem:[%s315 + $0x20] sm:$0xff]
        %v340 = vld [vmem:[%s315 + $0x28] sm:$0xff]
        %v341 = vld [vmem:[%s315 + $0x30] sm:$0xff]
        %v342 = vld [vmem:[%s315 + $0x38] sm:$0xff]
        %v343 = vld [vmem:[%s322] sm:$0xff]
        %v344 = vld [vmem:[%s322 + $0x8] sm:$0xff]
        %v345 = vld [vmem:[%s322 + $0x10] sm:$0xff]
        %v346 = vld [vmem:[%s322 + $0x18] sm:$0xff]
        %v347 = vld [vmem:[%s322 + $0x20] sm:$0xff]
        %v348 = vld [vmem:[%s322 + $0x28] sm:$0xff]
        %v349 = vld [vmem:[%s322 + $0x30] sm:$0xff]
        %v350 = vld [vmem:[%s322 + $0x38] sm:$0xff]
        %v351 = vld [vmem:[%s3] sm:$0xff]
        %v352 = vld [vmem:[%s3 + $0x8] sm:$0xff]
        %v353 = vld [vmem:[%s3 + $0x10] sm:$0xff]
        %v354 = vld [vmem:[%s3 + $0x18] sm:$0xff]
        %v355 = vld [vmem:[%s3 + $0x20] sm:$0xff]
        %v356 = vld [vmem:[%s3 + $0x28] sm:$0xff]
        %v357 = vld [vmem:[%s3 + $0x30] sm:$0xff]
        %v358 = vld [vmem:[%s3 + $0x38] sm:$0xff]
        %v359 = vld [vmem:[%s4] sm:$0xff]
        %v360 = vld [vmem:[%s4 + $0x8] sm:$0xff]
        %v361 = vld [vmem:[%s4 + $0x10] sm:$0xff]
        %v362 = vld [vmem:[%s4 + $0x18] sm:$0xff]
        %v363 = vld [vmem:[%s4 + $0x20] sm:$0xff]
        %v364 = vld [vmem:[%s4 + $0x28] sm:$0xff]
        %v365 = vld [vmem:[%s4 + $0x30] sm:$0xff]
        %v366 = vld [vmem:[%s4 + $0x38] sm:$0xff]
        %v367 = vld [vmem:[%s4 + $0x40] sm:$0xff]
        %v368 = vld [vmem:[%s4 + $0x48] sm:$0xff]
        %v369 = vld [vmem:[%s4 + $0x50] sm:$0xff]
        %v370 = vld [vmem:[%s4 + $0x58] sm:$0xff]
        %v371 = vld [vmem:[%s4 + $0x60] sm:$0xff]
        %v372 = vld [vmem:[%s4 + $0x68] sm:$0xff]
        %v373 = vld [vmem:[%s4 + $0x70] sm:$0xff]
        %v374 = vld [vmem:[%s4 + $0x78] sm:$0xff]
        %v375 = vlaneseq
        %v376 = vand.u32 %v375, 127
        %377 = vset.pattern.permute.xlu0 0
        %378 = vperm.xlu0 %377, %v327
        %v379 = vpop.permute.xlu0 %378
        %380 = vset.pattern.permute.xlu0 0
        %381 = vperm.xlu0 %380, %v328
        %v382 = vpop.permute.xlu0 %381
        %383 = vset.pattern.permute.xlu0 0
        %384 = vperm.xlu0 %383, %v329
        %v385 = vpop.permute.xlu0 %384
        %386 = vset.pattern.permute.xlu0 0
        %387 = vperm.xlu0 %386, %v330
        %v388 = vpop.permute.xlu0 %387
        %389 = vset.pattern.permute.xlu0 0
        %390 = vperm.xlu0 %389, %v331
        %v391 = vpop.permute.xlu0 %390
        %392 = vset.pattern.permute.xlu0 0
        %393 = vperm.xlu0 %392, %v332
        %v394 = vpop.permute.xlu0 %393
        %395 = vset.pattern.permute.xlu0 0
        %396 = vperm.xlu0 %395, %v333
        %v397 = vpop.permute.xlu0 %396
        %398 = vset.pattern.permute.xlu0 0
        %399 = vperm.xlu0 %398, %v334
        %v400 = vpop.permute.xlu0 %399
        %vm401 = vcmp.eq.s32.totalorder %v376, %v379
        %vm402 = vcmp.eq.s32.totalorder %v376, %v382
        %vm403 = vcmp.eq.s32.totalorder %v376, %v385
        %vm404 = vcmp.eq.s32.totalorder %v376, %v388
        %vm405 = vcmp.eq.s32.totalorder %v376, %v391
        %vm406 = vcmp.eq.s32.totalorder %v376, %v394
        %vm407 = vcmp.eq.s32.totalorder %v376, %v397
        %vm408 = vcmp.eq.s32.totalorder %v376, %v400
        %v409 = vsel %vm401, 1, 0
        %v410 = vsel %vm402, 1, 0
        %v411 = vsel %vm403, 1, 0
        %v412 = vsel %vm404, 1, 0
        %v413 = vsel %vm405, 1, 0
        %v414 = vsel %vm406, 1, 0
        %v415 = vsel %vm407, 1, 0
        %v416 = vsel %vm408, 1, 0
        %v417 = vcvt.s32.f32 %v409
        %v418 = vcvt.s32.f32 %v410
        %v419 = vcvt.s32.f32 %v411
        %v420 = vcvt.s32.f32 %v412
        %v421 = vcvt.s32.f32 %v413
        %v422 = vcvt.s32.f32 %v414
        %v423 = vcvt.s32.f32 %v415
        %v424 = vcvt.s32.f32 %v416
        %vm425 = vcmask 523264
        %v427 = vsel %vm425, %v417, 0
        %v430 = vsel %vm425, %v418, 0
        %v433 = vsel %vm425, %v419, 0
        %v436 = vsel %vm425, %v420, 0
        %v439 = vsel %vm425, %v421, 0
        %v442 = vsel %vm425, %v422, 0
        %v445 = vsel %vm425, %v423, 0
        %v448 = vsel %vm425, %v424, 0
        %450 = vmatprep.subr.mxu0 0.0
        %451 = vmatpush1.msra.mxu0 %v351
        %452 = vmatprep.subr.mxu0 0.0
        %453 = vmatpush1.msra.mxu0 %v352
        %454 = vmatprep.subr.mxu0 0.0
        %455 = vmatpush1.msra.mxu0 %v353
        %456 = vmatprep.subr.mxu0 0.0
        %457 = vmatpush1.msra.mxu0 %v354
        %458 = vmatprep.subr.mxu0 0.0
        %459 = vmatpush1.msra.mxu0 %v355
        %460 = vmatprep.subr.mxu0 0.0
        %461 = vmatpush1.msra.mxu0 %v356
        %462 = vmatprep.subr.mxu0 0.0
        %463 = vmatpush1.msra.mxu0 %v357
        %464 = vmatprep.subr.mxu0 0.0
        %465 = vmatpush1.msra.mxu0 %v358
        %466 = vmatprep.subr.mxu0 0.0
        %467 = vmatpush1.msra.mxu0 0.0
        %468 = vmatprep.subr.mxu0 0.0
        %469 = vmatpush1.msra.mxu0 0.0
        %470 = vmatprep.subr.mxu0 0.0
        %471 = vmatpush1.msra.mxu0 0.0
        %472 = vmatprep.subr.mxu0 0.0
        %473 = vmatpush1.msra.mxu0 0.0
        %474 = vmatprep.subr.mxu0 0.0
        %475 = vmatpush1.msra.mxu0 0.0
        %476 = vmatprep.subr.mxu0 0.0
        %477 = vmatpush1.msra.mxu0 0.0
        %478 = vmatprep.subr.mxu0 0.0
        %479 = vmatpush1.msra.mxu0 0.0
        %480 = vmatprep.subr.mxu0 0.0
        %481 = vmatpush1.msra.mxu0 0.0
        %482 = vmatprep.subr.mxu0 0.0
        %483 = vmatpush1.msra.mxu0 0.0
        %484 = vmatprep.subr.mxu0 0.0
        %485 = vmatpush1.msra.mxu0 0.0
        %486 = vmatprep.subr.mxu0 0.0
        %487 = vmatpush1.msra.mxu0 0.0
        %488 = vmatprep.subr.mxu0 0.0
        %489 = vmatpush1.msra.mxu0 0.0
        %490 = vmatprep.subr.mxu0 0.0
        %491 = vmatpush1.msra.mxu0 0.0
        %492 = vmatprep.subr.mxu0 0.0
        %493 = vmatpush1.msra.mxu0 0.0
        %494 = vmatprep.subr.mxu0 0.0
        %495 = vmatpush1.msra.mxu0 0.0
        %496 = vmatprep.subr.mxu0 0.0
        %497 = vmatpush1.msra.mxu0 0.0
        %498 = vmatprep.subr.mxu0 0.0
        %499 = vmatpush1.msra.mxu0 0.0
        %500 = vmatprep.subr.mxu0 0.0
        %501 = vmatpush1.msra.mxu0 0.0
        %502 = vmatprep.subr.mxu0 0.0
        %503 = vmatpush1.msra.mxu0 0.0
        %504 = vmatprep.subr.mxu0 0.0
        %505 = vmatpush1.msra.mxu0 0.0
        %506 = vmatprep.subr.mxu0 0.0
        %507 = vmatpush1.msra.mxu0 0.0
        %508 = vmatprep.subr.mxu0 0.0
        %509 = vmatpush1.msra.mxu0 0.0
        %510 = vmatprep.subr.mxu0 0.0
        %511 = vmatpush1.msra.mxu0 0.0
        %512 = vmatprep.subr.mxu0 0.0
        %513 = vmatpush1.msra.mxu0 0.0
        %514 = vmatprep.mubr.f32.mxu0 0.0
        %515 = vmatmul.mubr.f32.gmra.mrb[0].mxu0 %v427
        %v516 = vpop.f32.mrb[0].mxu0
        %v517 = vadd.f32 0.0, %v516
        %v518 = vpop.f32.mrb[0].mxu0
        %519 = vmatprep.mubr.f32.mxu0 0.0
        %520 = vmatmul.mubr.f32.gmra.mrb[0].mxu0 %v430
        %v521 = vpop.f32.mrb[0].mxu0
        %v522 = vadd.f32 0.0, %v521
        %v523 = vpop.f32.mrb[0].mxu0
        %524 = vmatprep.mubr.f32.mxu0 0.0
        %525 = vmatmul.mubr.f32.gmra.mrb[0].mxu0 %v433
        %v526 = vpop.f32.mrb[0].mxu0
        %v527 = vadd.f32 0.0, %v526
        %v528 = vpop.f32.mrb[0].mxu0
        %529 = vmatprep.mubr.f32.mxu0 0.0
        %530 = vmatmul.mubr.f32.gmra.mrb[0].mxu0 %v436
        %v531 = vpop.f32.mrb[0].mxu0
        %v532 = vadd.f32 0.0, %v531
        %v533 = vpop.f32.mrb[0].mxu0
        %534 = vmatprep.mubr.f32.mxu0 0.0
        %535 = vmatmul.mubr.f32.gmra.mrb[0].mxu0 %v439
        %v536 = vpop.f32.mrb[0].mxu0
        %v537 = vadd.f32 0.0, %v536
        %v538 = vpop.f32.mrb[0].mxu0
        %539 = vmatprep.mubr.f32.mxu0 0.0
        %540 = vmatmul.mubr.f32.gmra.mrb[0].mxu0 %v442
        %v541 = vpop.f32.mrb[0].mxu0
        %v542 = vadd.f32 0.0, %v541
        %v543 = vpop.f32.mrb[0].mxu0
        %544 = vmatprep.mubr.f32.mxu0 0.0
        %545 = vmatmul.mubr.f32.gmra.mrb[0].mxu0 %v445
        %v546 = vpop.f32.mrb[0].mxu0
        %v547 = vadd.f32 0.0, %v546
        %v548 = vpop.f32.mrb[0].mxu0
        %549 = vmatprep.mubr.f32.mxu0 0.0
        %550 = vmatmul.mubr.f32.gmra.mrb[0].mxu0 %v448
        %v551 = vpop.f32.mrb[0].mxu0
        %v552 = vadd.f32 0.0, %v551
        %v553 = vpop.f32.mrb[0].mxu0
        %554 = vdwg.mxu0
        %555 = vmatprep.subr.mxu0 0.0
        %556 = vmatpush1.xpose.msra.mxu0 %v359
        %557 = vmatprep.subr.mxu0 0.0
        %558 = vmatpush1.xpose.msra.mxu0 %v360
        %559 = vmatprep.subr.mxu0 0.0
        %560 = vmatpush1.xpose.msra.mxu0 %v361
        %561 = vmatprep.subr.mxu0 0.0
        %562 = vmatpush1.xpose.msra.mxu0 %v362
        %563 = vmatprep.subr.mxu0 0.0
        %564 = vmatpush1.xpose.msra.mxu0 %v363
        %565 = vmatprep.subr.mxu0 0.0
        %566 = vmatpush1.xpose.msra.mxu0 %v364
        %567 = vmatprep.subr.mxu0 0.0
        %568 = vmatpush1.xpose.msra.mxu0 %v365
        %569 = vmatprep.subr.mxu0 0.0
        %570 = vmatpush1.xpose.msra.mxu0 %v366
        %571 = vmatprep.subr.mxu0 0.0
        %572 = vmatpush1.xpose.msra.mxu0 %v367
        %573 = vmatprep.subr.mxu0 0.0
        %574 = vmatpush1.xpose.msra.mxu0 %v368
        %575 = vmatprep.subr.mxu0 0.0
        %576 = vmatpush1.xpose.msra.mxu0 %v369
        %577 = vmatprep.subr.mxu0 0.0
        %578 = vmatpush1.xpose.msra.mxu0 %v370
        %579 = vmatprep.subr.mxu0 0.0
        %580 = vmatpush1.xpose.msra.mxu0 %v371
        %581 = vmatprep.subr.mxu0 0.0
        %582 = vmatpush1.xpose.msra.mxu0 %v372
        %583 = vmatprep.subr.mxu0 0.0
        %584 = vmatpush1.xpose.msra.mxu0 %v373
        %585 = vmatprep.subr.mxu0 0.0
        %586 = vmatpush1.xpose.msra.mxu0 %v374
        %587 = vmatprep.subr.mxu0 0.0
        %588 = vmatpush1.xpose.msra.mxu0 0.0
        %589 = vmatprep.subr.mxu0 0.0
        %590 = vmatpush1.xpose.msra.mxu0 0.0
        %591 = vmatprep.subr.mxu0 0.0
        %592 = vmatpush1.xpose.msra.mxu0 0.0
        %593 = vmatprep.subr.mxu0 0.0
        %594 = vmatpush1.xpose.msra.mxu0 0.0
        %595 = vmatprep.subr.mxu0 0.0
        %596 = vmatpush1.xpose.msra.mxu0 0.0
        %597 = vmatprep.subr.mxu0 0.0
        %598 = vmatpush1.xpose.msra.mxu0 0.0
        %599 = vmatprep.subr.mxu0 0.0
        %600 = vmatpush1.xpose.msra.mxu0 0.0
        %601 = vmatprep.subr.mxu0 0.0
        %602 = vmatpush1.xpose.msra.mxu0 0.0
        %603 = vmatprep.subr.mxu0 0.0
        %604 = vmatpush1.xpose.msra.mxu0 0.0
        %605 = vmatprep.subr.mxu0 0.0
        %606 = vmatpush1.xpose.msra.mxu0 0.0
        %607 = vmatprep.subr.mxu0 0.0
        %608 = vmatpush1.xpose.msra.mxu0 0.0
        %609 = vmatprep.subr.mxu0 0.0
        %610 = vmatpush1.xpose.msra.mxu0 0.0
        %611 = vmatprep.subr.mxu0 0.0
        %612 = vmatpush1.xpose.msra.mxu0 0.0
        %613 = vmatprep.subr.mxu0 0.0
        %614 = vmatpush1.xpose.msra.mxu0 0.0
        %615 = vmatprep.subr.mxu0 0.0
        %616 = vmatpush1.xpose.msra.mxu0 0.0
        %617 = vmatprep.subr.mxu0 0.0
        %618 = vmatpush1.xpose.msra.mxu0 0.0
        %619 = vmatprep.mubr.f32.mxu0 0.0
        %620 = vmatmul.mubr.f32.gmra.mrb[0].mxu0 %v517
        %v621 = vpop.f32.mrb[0].mxu0
        %v622 = vadd.f32 0.0, %v621
        %v623 = vpop.f32.mrb[0].mxu0
        %624 = vmatprep.mubr.f32.mxu0 0.0
        %625 = vmatmul.mubr.f32.gmra.mrb[0].mxu0 %v522
        %v626 = vpop.f32.mrb[0].mxu0
        %v627 = vadd.f32 0.0, %v626
        %v628 = vpop.f32.mrb[0].mxu0
        %629 = vmatprep.mubr.f32.mxu0 0.0
        %630 = vmatmul.mubr.f32.gmra.mrb[0].mxu0 %v527
        %v631 = vpop.f32.mrb[0].mxu0
        %v632 = vadd.f32 0.0, %v631
        %v633 = vpop.f32.mrb[0].mxu0
        %634 = vmatprep.mubr.f32.mxu0 0.0
        %635 = vmatmul.mubr.f32.gmra.mrb[0].mxu0 %v532
        %v636 = vpop.f32.mrb[0].mxu0
        %v637 = vadd.f32 0.0, %v636
        %v638 = vpop.f32.mrb[0].mxu0
        %639 = vmatprep.mubr.f32.mxu0 0.0
        %640 = vmatmul.mubr.f32.gmra.mrb[0].mxu0 %v537
        %v641 = vpop.f32.mrb[0].mxu0
        %v642 = vadd.f32 0.0, %v641
        %v643 = vpop.f32.mrb[0].mxu0
        %644 = vmatprep.mubr.f32.mxu0 0.0
        %645 = vmatmul.mubr.f32.gmra.mrb[0].mxu0 %v542
        %v646 = vpop.f32.mrb[0].mxu0
        %v647 = vadd.f32 0.0, %v646
        %v648 = vpop.f32.mrb[0].mxu0
        %649 = vmatprep.mubr.f32.mxu0 0.0
        %650 = vmatmul.mubr.f32.gmra.mrb[0].mxu0 %v547
        %v651 = vpop.f32.mrb[0].mxu0
        %v652 = vadd.f32 0.0, %v651
        %v653 = vpop.f32.mrb[0].mxu0
        %654 = vmatprep.mubr.f32.mxu0 0.0
        %655 = vmatmul.mubr.f32.gmra.mrb[0].mxu0 %v552
        %v656 = vpop.f32.mrb[0].mxu0
        %v657 = vadd.f32 0.0, %v656
        %v658 = vpop.f32.mrb[0].mxu0
        %659 = vdwg.mxu0
        %v660 = vld [vmem:[%s5] sm:$0x1]
        %v661 = vmul.f32 %v622, 2.0
        %v662 = vmul.f32 %v627, 2.0
        %v663 = vmul.f32 %v632, 2.0
        %v664 = vmul.f32 %v637, 2.0
        %v665 = vmul.f32 %v642, 2.0
        %v666 = vmul.f32 %v647, 2.0
        %v667 = vmul.f32 %v652, 2.0
        %v668 = vmul.f32 %v657, 2.0
        %v670 = vlaneseq
        %v671 = vshrl.u32 %v670, 7
        %v672 = vsub.s32 0, %v671
        %v673 = vrot.slane %v660, %v672
        %v675 = vsub.f32 %v673, %v661
        %v676 = vsub.f32 %v673, %v662
        %v677 = vsub.f32 %v673, %v663
        %v678 = vsub.f32 %v673, %v664
        %v679 = vsub.f32 %v673, %v665
        %v680 = vsub.f32 %v673, %v666
        %v681 = vsub.f32 %v673, %v667
        %v682 = vsub.f32 %v673, %v668
        %683 = vset.pattern.permute.xlu0 0
        %684 = vperm.xlu0 %683, %v335
        %v685 = vpop.permute.xlu0 %684
        %686 = vset.pattern.permute.xlu0 0
        %687 = vperm.xlu0 %686, %v336
        %v688 = vpop.permute.xlu0 %687
        %689 = vset.pattern.permute.xlu0 0
        %690 = vperm.xlu0 %689, %v337
        %v691 = vpop.permute.xlu0 %690
        %692 = vset.pattern.permute.xlu0 0
        %693 = vperm.xlu0 %692, %v338
        %v694 = vpop.permute.xlu0 %693
        %695 = vset.pattern.permute.xlu0 0
        %696 = vperm.xlu0 %695, %v339
        %v697 = vpop.permute.xlu0 %696
        %698 = vset.pattern.permute.xlu0 0
        %699 = vperm.xlu0 %698, %v340
        %v700 = vpop.permute.xlu0 %699
        %701 = vset.pattern.permute.xlu0 0
        %702 = vperm.xlu0 %701, %v341
        %v703 = vpop.permute.xlu0 %702
        %704 = vset.pattern.permute.xlu0 0
        %705 = vperm.xlu0 %704, %v342
        %v706 = vpop.permute.xlu0 %705
        %vm707 = vcmp.eq.s32.totalorder %v376, %v685
        %vm708 = vcmp.eq.s32.totalorder %v376, %v688
        %vm709 = vcmp.eq.s32.totalorder %v376, %v691
        %vm710 = vcmp.eq.s32.totalorder %v376, %v694
        %vm711 = vcmp.eq.s32.totalorder %v376, %v697
        %vm712 = vcmp.eq.s32.totalorder %v376, %v700
        %vm713 = vcmp.eq.s32.totalorder %v376, %v703
        %vm714 = vcmp.eq.s32.totalorder %v376, %v706
        %v715 = vsel %vm707, %v675, 0.0
        %v716 = vsel %vm708, %v676, 0.0
        %v717 = vsel %vm709, %v677, 0.0
        %v718 = vsel %vm710, %v678, 0.0
        %v719 = vsel %vm711, %v679, 0.0
        %v720 = vsel %vm712, %v680, 0.0
        %v721 = vsel %vm713, %v681, 0.0
        %v722 = vsel %vm714, %v682, 0.0
        %723 = vadd.xlane.f32.xlu0 %v715
        %v724 = vpop.xlane.xlu0 %723
        %725 = vadd.xlane.f32.xlu0 %v716
        %v726 = vpop.xlane.xlu0 %725
        %727 = vadd.xlane.f32.xlu0 %v717
        %v728 = vpop.xlane.xlu0 %727
        %729 = vadd.xlane.f32.xlu0 %v718
        %v730 = vpop.xlane.xlu0 %729
        %731 = vadd.xlane.f32.xlu0 %v719
        %v732 = vpop.xlane.xlu0 %731
        %733 = vadd.xlane.f32.xlu0 %v720
        %v734 = vpop.xlane.xlu0 %733
        %735 = vadd.xlane.f32.xlu0 %v721
        %v736 = vpop.xlane.xlu0 %735
        %737 = vadd.xlane.f32.xlu0 %v722
        %v738 = vpop.xlane.xlu0 %737
        %739 = vset.pattern.permute.xlu0 0
        %740 = vperm.xlu0 %739, %v343
        %v741 = vpop.permute.xlu0 %740
        %742 = vset.pattern.permute.xlu0 0
        %743 = vperm.xlu0 %742, %v344
        %v744 = vpop.permute.xlu0 %743
        %745 = vset.pattern.permute.xlu0 0
        %746 = vperm.xlu0 %745, %v345
        %v747 = vpop.permute.xlu0 %746
        %748 = vset.pattern.permute.xlu0 0
        %749 = vperm.xlu0 %748, %v346
        %v750 = vpop.permute.xlu0 %749
        %751 = vset.pattern.permute.xlu0 0
        %752 = vperm.xlu0 %751, %v347
        %v753 = vpop.permute.xlu0 %752
        %754 = vset.pattern.permute.xlu0 0
        %755 = vperm.xlu0 %754, %v348
        %v756 = vpop.permute.xlu0 %755
        %757 = vset.pattern.permute.xlu0 0
        %758 = vperm.xlu0 %757, %v349
        %v759 = vpop.permute.xlu0 %758
        %760 = vset.pattern.permute.xlu0 0
        %761 = vperm.xlu0 %760, %v350
        %v762 = vpop.permute.xlu0 %761
        %vm763 = vcmp.eq.s32.totalorder %v376, %v741
        %vm764 = vcmp.eq.s32.totalorder %v376, %v744
        %vm765 = vcmp.eq.s32.totalorder %v376, %v747
        %vm766 = vcmp.eq.s32.totalorder %v376, %v750
        %vm767 = vcmp.eq.s32.totalorder %v376, %v753
        %vm768 = vcmp.eq.s32.totalorder %v376, %v756
        %vm769 = vcmp.eq.s32.totalorder %v376, %v759
        %vm770 = vcmp.eq.s32.totalorder %v376, %v762
        %v771 = vsel %vm763, %v675, inf
        %v772 = vsel %vm764, %v676, inf
        %v773 = vsel %vm765, %v677, inf
        %v774 = vsel %vm766, %v678, inf
        %v775 = vsel %vm767, %v679, inf
        %v776 = vsel %vm768, %v680, inf
        %v777 = vsel %vm769, %v681, inf
        %v778 = vsel %vm770, %v682, inf
        %779 = vmin.xlane.f32.xlu0 %v771
        %v780 = vpop.xlane.xlu0 %779
        %781 = vmin.xlane.f32.xlu0 %v772
        %v782 = vpop.xlane.xlu0 %781
        %783 = vmin.xlane.f32.xlu0 %v773
        %v784 = vpop.xlane.xlu0 %783
        %785 = vmin.xlane.f32.xlu0 %v774
        %v786 = vpop.xlane.xlu0 %785
        %787 = vmin.xlane.f32.xlu0 %v775
        %v788 = vpop.xlane.xlu0 %787
        %789 = vmin.xlane.f32.xlu0 %v776
        %v790 = vpop.xlane.xlu0 %789
        %791 = vmin.xlane.f32.xlu0 %v777
        %v792 = vpop.xlane.xlu0 %791
        %793 = vmin.xlane.f32.xlu0 %v778
        %v794 = vpop.xlane.xlu0 %793
        %795 = vset.pattern.permute.xlu0 1
        %796 = vperm.xlu0 %795, %v343
        %v797 = vpop.permute.xlu0 %796
        %798 = vset.pattern.permute.xlu0 1
        %799 = vperm.xlu0 %798, %v344
        %v800 = vpop.permute.xlu0 %799
        %801 = vset.pattern.permute.xlu0 1
        %802 = vperm.xlu0 %801, %v345
        %v803 = vpop.permute.xlu0 %802
        %804 = vset.pattern.permute.xlu0 1
        %805 = vperm.xlu0 %804, %v346
        %v806 = vpop.permute.xlu0 %805
        %807 = vset.pattern.permute.xlu0 1
        %808 = vperm.xlu0 %807, %v347
        %v809 = vpop.permute.xlu0 %808
        %810 = vset.pattern.permute.xlu0 1
        %811 = vperm.xlu0 %810, %v348
        %v812 = vpop.permute.xlu0 %811
        %813 = vset.pattern.permute.xlu0 1
        %814 = vperm.xlu0 %813, %v349
        %v815 = vpop.permute.xlu0 %814
        %816 = vset.pattern.permute.xlu0 1
        %817 = vperm.xlu0 %816, %v350
        %v818 = vpop.permute.xlu0 %817
        %vm819 = vcmp.eq.s32.totalorder %v376, %v797
        %vm820 = vcmp.eq.s32.totalorder %v376, %v800
        %vm821 = vcmp.eq.s32.totalorder %v376, %v803
        %vm822 = vcmp.eq.s32.totalorder %v376, %v806
        %vm823 = vcmp.eq.s32.totalorder %v376, %v809
        %vm824 = vcmp.eq.s32.totalorder %v376, %v812
        %vm825 = vcmp.eq.s32.totalorder %v376, %v815
        %vm826 = vcmp.eq.s32.totalorder %v376, %v818
        %v827 = vsel %vm819, %v675, inf
        %v828 = vsel %vm820, %v676, inf
        %v829 = vsel %vm821, %v677, inf
        %v830 = vsel %vm822, %v678, inf
        %v831 = vsel %vm823, %v679, inf
        %v832 = vsel %vm824, %v680, inf
        %v833 = vsel %vm825, %v681, inf
        %v834 = vsel %vm826, %v682, inf
        %835 = vmin.xlane.f32.xlu0 %v827
        %v836 = vpop.xlane.xlu0 %835
        %837 = vmin.xlane.f32.xlu0 %v828
        %v838 = vpop.xlane.xlu0 %837
        %839 = vmin.xlane.f32.xlu0 %v829
        %v840 = vpop.xlane.xlu0 %839
        %841 = vmin.xlane.f32.xlu0 %v830
        %v842 = vpop.xlane.xlu0 %841
        %843 = vmin.xlane.f32.xlu0 %v831
        %v844 = vpop.xlane.xlu0 %843
        %845 = vmin.xlane.f32.xlu0 %v832
        %v846 = vpop.xlane.xlu0 %845
        %847 = vmin.xlane.f32.xlu0 %v833
        %v848 = vpop.xlane.xlu0 %847
        %849 = vmin.xlane.f32.xlu0 %v834
        %v850 = vpop.xlane.xlu0 %849
        %v851 = vmin.f32 %v780, %v836
        %v852 = vmin.f32 %v782, %v838
        %v853 = vmin.f32 %v784, %v840
        %v854 = vmin.f32 %v786, %v842
        %v855 = vmin.f32 %v788, %v844
        %v856 = vmin.f32 %v790, %v846
        %v857 = vmin.f32 %v792, %v848
        %v858 = vmin.f32 %v794, %v850
        %859 = vset.pattern.permute.xlu0 2
        %860 = vperm.xlu0 %859, %v343
        %v861 = vpop.permute.xlu0 %860
        %862 = vset.pattern.permute.xlu0 2
        %863 = vperm.xlu0 %862, %v344
        %v864 = vpop.permute.xlu0 %863
        %865 = vset.pattern.permute.xlu0 2
        %866 = vperm.xlu0 %865, %v345
        %v867 = vpop.permute.xlu0 %866
        %868 = vset.pattern.permute.xlu0 2
        %869 = vperm.xlu0 %868, %v346
        %v870 = vpop.permute.xlu0 %869
        %871 = vset.pattern.permute.xlu0 2
        %872 = vperm.xlu0 %871, %v347
        %v873 = vpop.permute.xlu0 %872
        %874 = vset.pattern.permute.xlu0 2
        %875 = vperm.xlu0 %874, %v348
        %v876 = vpop.permute.xlu0 %875
        %877 = vset.pattern.permute.xlu0 2
        %878 = vperm.xlu0 %877, %v349
        %v879 = vpop.permute.xlu0 %878
        %880 = vset.pattern.permute.xlu0 2
        %881 = vperm.xlu0 %880, %v350
        %v882 = vpop.permute.xlu0 %881
        %vm883 = vcmp.eq.s32.totalorder %v376, %v861
        %vm884 = vcmp.eq.s32.totalorder %v376, %v864
        %vm885 = vcmp.eq.s32.totalorder %v376, %v867
        %vm886 = vcmp.eq.s32.totalorder %v376, %v870
        %vm887 = vcmp.eq.s32.totalorder %v376, %v873
        %vm888 = vcmp.eq.s32.totalorder %v376, %v876
        %vm889 = vcmp.eq.s32.totalorder %v376, %v879
        %vm890 = vcmp.eq.s32.totalorder %v376, %v882
        %v891 = vsel %vm883, %v675, inf
        %v892 = vsel %vm884, %v676, inf
        %v893 = vsel %vm885, %v677, inf
        %v894 = vsel %vm886, %v678, inf
        %v895 = vsel %vm887, %v679, inf
        %v896 = vsel %vm888, %v680, inf
        %v897 = vsel %vm889, %v681, inf
        %v898 = vsel %vm890, %v682, inf
        %899 = vmin.xlane.f32.xlu0 %v891
        %v900 = vpop.xlane.xlu0 %899
        %901 = vmin.xlane.f32.xlu0 %v892
        %v902 = vpop.xlane.xlu0 %901
        %903 = vmin.xlane.f32.xlu0 %v893
        %v904 = vpop.xlane.xlu0 %903
        %905 = vmin.xlane.f32.xlu0 %v894
        %v906 = vpop.xlane.xlu0 %905
        %907 = vmin.xlane.f32.xlu0 %v895
        %v908 = vpop.xlane.xlu0 %907
        %909 = vmin.xlane.f32.xlu0 %v896
        %v910 = vpop.xlane.xlu0 %909
        %911 = vmin.xlane.f32.xlu0 %v897
        %v912 = vpop.xlane.xlu0 %911
        %913 = vmin.xlane.f32.xlu0 %v898
        %v914 = vpop.xlane.xlu0 %913
        %v915 = vmin.f32 %v851, %v900
        %v916 = vmin.f32 %v852, %v902
        %v917 = vmin.f32 %v853, %v904
        %v918 = vmin.f32 %v854, %v906
        %v919 = vmin.f32 %v855, %v908
        %v920 = vmin.f32 %v856, %v910
        %v921 = vmin.f32 %v857, %v912
        %v922 = vmin.f32 %v858, %v914
        %923 = vset.pattern.permute.xlu0 3
        %924 = vperm.xlu0 %923, %v343
        %v925 = vpop.permute.xlu0 %924
        %926 = vset.pattern.permute.xlu0 3
        %927 = vperm.xlu0 %926, %v344
        %v928 = vpop.permute.xlu0 %927
        %929 = vset.pattern.permute.xlu0 3
        %930 = vperm.xlu0 %929, %v345
        %v931 = vpop.permute.xlu0 %930
        %932 = vset.pattern.permute.xlu0 3
        %933 = vperm.xlu0 %932, %v346
        %v934 = vpop.permute.xlu0 %933
        %935 = vset.pattern.permute.xlu0 3
        %936 = vperm.xlu0 %935, %v347
        %v937 = vpop.permute.xlu0 %936
        %938 = vset.pattern.permute.xlu0 3
        %939 = vperm.xlu0 %938, %v348
        %v940 = vpop.permute.xlu0 %939
        %941 = vset.pattern.permute.xlu0 3
        %942 = vperm.xlu0 %941, %v349
        %v943 = vpop.permute.xlu0 %942
        %944 = vset.pattern.permute.xlu0 3
        %945 = vperm.xlu0 %944, %v350
        %v946 = vpop.permute.xlu0 %945
        %vm947 = vcmp.eq.s32.totalorder %v376, %v925
        %vm948 = vcmp.eq.s32.totalorder %v376, %v928
        %vm949 = vcmp.eq.s32.totalorder %v376, %v931
        %vm950 = vcmp.eq.s32.totalorder %v376, %v934
        %vm951 = vcmp.eq.s32.totalorder %v376, %v937
        %vm952 = vcmp.eq.s32.totalorder %v376, %v940
        %vm953 = vcmp.eq.s32.totalorder %v376, %v943
        %vm954 = vcmp.eq.s32.totalorder %v376, %v946
        %v955 = vsel %vm947, %v675, inf
        %v956 = vsel %vm948, %v676, inf
        %v957 = vsel %vm949, %v677, inf
        %v958 = vsel %vm950, %v678, inf
        %v959 = vsel %vm951, %v679, inf
        %v960 = vsel %vm952, %v680, inf
        %v961 = vsel %vm953, %v681, inf
        %v962 = vsel %vm954, %v682, inf
        %963 = vmin.xlane.f32.xlu0 %v955
        %v964 = vpop.xlane.xlu0 %963
        %965 = vmin.xlane.f32.xlu0 %v956
        %v966 = vpop.xlane.xlu0 %965
        %967 = vmin.xlane.f32.xlu0 %v957
        %v968 = vpop.xlane.xlu0 %967
        %969 = vmin.xlane.f32.xlu0 %v958
        %v970 = vpop.xlane.xlu0 %969
        %971 = vmin.xlane.f32.xlu0 %v959
        %v972 = vpop.xlane.xlu0 %971
        %973 = vmin.xlane.f32.xlu0 %v960
        %v974 = vpop.xlane.xlu0 %973
        %975 = vmin.xlane.f32.xlu0 %v961
        %v976 = vpop.xlane.xlu0 %975
        %977 = vmin.xlane.f32.xlu0 %v962
        %v978 = vpop.xlane.xlu0 %977
        %v979 = vmin.f32 %v915, %v964
        %v980 = vmin.f32 %v916, %v966
        %v981 = vmin.f32 %v917, %v968
        %v982 = vmin.f32 %v918, %v970
        %v983 = vmin.f32 %v919, %v972
        %v984 = vmin.f32 %v920, %v974
        %v985 = vmin.f32 %v921, %v976
        %v986 = vmin.f32 %v922, %v978
        %987 = vset.pattern.permute.xlu0 4
        %988 = vperm.xlu0 %987, %v343
        %v989 = vpop.permute.xlu0 %988
        %990 = vset.pattern.permute.xlu0 4
        %991 = vperm.xlu0 %990, %v344
        %v992 = vpop.permute.xlu0 %991
        %993 = vset.pattern.permute.xlu0 4
        %994 = vperm.xlu0 %993, %v345
        %v995 = vpop.permute.xlu0 %994
        %996 = vset.pattern.permute.xlu0 4
        %997 = vperm.xlu0 %996, %v346
        %v998 = vpop.permute.xlu0 %997
        %999 = vset.pattern.permute.xlu0 4
        %1000 = vperm.xlu0 %999, %v347
        %v1001 = vpop.permute.xlu0 %1000
        %1002 = vset.pattern.permute.xlu0 4
        %1003 = vperm.xlu0 %1002, %v348
        %v1004 = vpop.permute.xlu0 %1003
        %1005 = vset.pattern.permute.xlu0 4
        %1006 = vperm.xlu0 %1005, %v349
        %v1007 = vpop.permute.xlu0 %1006
        %1008 = vset.pattern.permute.xlu0 4
        %1009 = vperm.xlu0 %1008, %v350
        %v1010 = vpop.permute.xlu0 %1009
        %vm1011 = vcmp.eq.s32.totalorder %v376, %v989
        %vm1012 = vcmp.eq.s32.totalorder %v376, %v992
        %vm1013 = vcmp.eq.s32.totalorder %v376, %v995
        %vm1014 = vcmp.eq.s32.totalorder %v376, %v998
        %vm1015 = vcmp.eq.s32.totalorder %v376, %v1001
        %vm1016 = vcmp.eq.s32.totalorder %v376, %v1004
        %vm1017 = vcmp.eq.s32.totalorder %v376, %v1007
        %vm1018 = vcmp.eq.s32.totalorder %v376, %v1010
        %v1019 = vsel %vm1011, %v675, inf
        %v1020 = vsel %vm1012, %v676, inf
        %v1021 = vsel %vm1013, %v677, inf
        %v1022 = vsel %vm1014, %v678, inf
        %v1023 = vsel %vm1015, %v679, inf
        %v1024 = vsel %vm1016, %v680, inf
        %v1025 = vsel %vm1017, %v681, inf
        %v1026 = vsel %vm1018, %v682, inf
        %1027 = vmin.xlane.f32.xlu0 %v1019
        %v1028 = vpop.xlane.xlu0 %1027
        %1029 = vmin.xlane.f32.xlu0 %v1020
        %v1030 = vpop.xlane.xlu0 %1029
        %1031 = vmin.xlane.f32.xlu0 %v1021
        %v1032 = vpop.xlane.xlu0 %1031
        %1033 = vmin.xlane.f32.xlu0 %v1022
        %v1034 = vpop.xlane.xlu0 %1033
        %1035 = vmin.xlane.f32.xlu0 %v1023
        %v1036 = vpop.xlane.xlu0 %1035
        %1037 = vmin.xlane.f32.xlu0 %v1024
        %v1038 = vpop.xlane.xlu0 %1037
        %1039 = vmin.xlane.f32.xlu0 %v1025
        %v1040 = vpop.xlane.xlu0 %1039
        %1041 = vmin.xlane.f32.xlu0 %v1026
        %v1042 = vpop.xlane.xlu0 %1041
        %v1043 = vmin.f32 %v979, %v1028
        %v1044 = vmin.f32 %v980, %v1030
        %v1045 = vmin.f32 %v981, %v1032
        %v1046 = vmin.f32 %v982, %v1034
        %v1047 = vmin.f32 %v983, %v1036
        %v1048 = vmin.f32 %v984, %v1038
        %v1049 = vmin.f32 %v985, %v1040
        %v1050 = vmin.f32 %v986, %v1042
        %1051 = vset.pattern.permute.xlu0 5
        %1052 = vperm.xlu0 %1051, %v343
        %v1053 = vpop.permute.xlu0 %1052
        %1054 = vset.pattern.permute.xlu0 5
        %1055 = vperm.xlu0 %1054, %v344
        %v1056 = vpop.permute.xlu0 %1055
        %1057 = vset.pattern.permute.xlu0 5
        %1058 = vperm.xlu0 %1057, %v345
        %v1059 = vpop.permute.xlu0 %1058
        %1060 = vset.pattern.permute.xlu0 5
        %1061 = vperm.xlu0 %1060, %v346
        %v1062 = vpop.permute.xlu0 %1061
        %1063 = vset.pattern.permute.xlu0 5
        %1064 = vperm.xlu0 %1063, %v347
        %v1065 = vpop.permute.xlu0 %1064
        %1066 = vset.pattern.permute.xlu0 5
        %1067 = vperm.xlu0 %1066, %v348
        %v1068 = vpop.permute.xlu0 %1067
        %1069 = vset.pattern.permute.xlu0 5
        %1070 = vperm.xlu0 %1069, %v349
        %v1071 = vpop.permute.xlu0 %1070
        %1072 = vset.pattern.permute.xlu0 5
        %1073 = vperm.xlu0 %1072, %v350
        %v1074 = vpop.permute.xlu0 %1073
        %vm1075 = vcmp.eq.s32.totalorder %v376, %v1053
        %vm1076 = vcmp.eq.s32.totalorder %v376, %v1056
        %vm1077 = vcmp.eq.s32.totalorder %v376, %v1059
        %vm1078 = vcmp.eq.s32.totalorder %v376, %v1062
        %vm1079 = vcmp.eq.s32.totalorder %v376, %v1065
        %vm1080 = vcmp.eq.s32.totalorder %v376, %v1068
        %vm1081 = vcmp.eq.s32.totalorder %v376, %v1071
        %vm1082 = vcmp.eq.s32.totalorder %v376, %v1074
        %v1083 = vsel %vm1075, %v675, inf
        %v1084 = vsel %vm1076, %v676, inf
        %v1085 = vsel %vm1077, %v677, inf
        %v1086 = vsel %vm1078, %v678, inf
        %v1087 = vsel %vm1079, %v679, inf
        %v1088 = vsel %vm1080, %v680, inf
        %v1089 = vsel %vm1081, %v681, inf
        %v1090 = vsel %vm1082, %v682, inf
        %1091 = vmin.xlane.f32.xlu0 %v1083
        %v1092 = vpop.xlane.xlu0 %1091
        %1093 = vmin.xlane.f32.xlu0 %v1084
        %v1094 = vpop.xlane.xlu0 %1093
        %1095 = vmin.xlane.f32.xlu0 %v1085
        %v1096 = vpop.xlane.xlu0 %1095
        %1097 = vmin.xlane.f32.xlu0 %v1086
        %v1098 = vpop.xlane.xlu0 %1097
        %1099 = vmin.xlane.f32.xlu0 %v1087
        %v1100 = vpop.xlane.xlu0 %1099
        %1101 = vmin.xlane.f32.xlu0 %v1088
        %v1102 = vpop.xlane.xlu0 %1101
        %1103 = vmin.xlane.f32.xlu0 %v1089
        %v1104 = vpop.xlane.xlu0 %1103
        %1105 = vmin.xlane.f32.xlu0 %v1090
        %v1106 = vpop.xlane.xlu0 %1105
        %v1107 = vmin.f32 %v1043, %v1092
        %v1108 = vmin.f32 %v1044, %v1094
        %v1109 = vmin.f32 %v1045, %v1096
        %v1110 = vmin.f32 %v1046, %v1098
        %v1111 = vmin.f32 %v1047, %v1100
        %v1112 = vmin.f32 %v1048, %v1102
        %v1113 = vmin.f32 %v1049, %v1104
        %v1114 = vmin.f32 %v1050, %v1106
        %1115 = vset.pattern.permute.xlu0 6
        %1116 = vperm.xlu0 %1115, %v343
        %v1117 = vpop.permute.xlu0 %1116
        %1118 = vset.pattern.permute.xlu0 6
        %1119 = vperm.xlu0 %1118, %v344
        %v1120 = vpop.permute.xlu0 %1119
        %1121 = vset.pattern.permute.xlu0 6
        %1122 = vperm.xlu0 %1121, %v345
        %v1123 = vpop.permute.xlu0 %1122
        %1124 = vset.pattern.permute.xlu0 6
        %1125 = vperm.xlu0 %1124, %v346
        %v1126 = vpop.permute.xlu0 %1125
        %1127 = vset.pattern.permute.xlu0 6
        %1128 = vperm.xlu0 %1127, %v347
        %v1129 = vpop.permute.xlu0 %1128
        %1130 = vset.pattern.permute.xlu0 6
        %1131 = vperm.xlu0 %1130, %v348
        %v1132 = vpop.permute.xlu0 %1131
        %1133 = vset.pattern.permute.xlu0 6
        %1134 = vperm.xlu0 %1133, %v349
        %v1135 = vpop.permute.xlu0 %1134
        %1136 = vset.pattern.permute.xlu0 6
        %1137 = vperm.xlu0 %1136, %v350
        %v1138 = vpop.permute.xlu0 %1137
        %vm1139 = vcmp.eq.s32.totalorder %v376, %v1117
        %vm1140 = vcmp.eq.s32.totalorder %v376, %v1120
        %vm1141 = vcmp.eq.s32.totalorder %v376, %v1123
        %vm1142 = vcmp.eq.s32.totalorder %v376, %v1126
        %vm1143 = vcmp.eq.s32.totalorder %v376, %v1129
        %vm1144 = vcmp.eq.s32.totalorder %v376, %v1132
        %vm1145 = vcmp.eq.s32.totalorder %v376, %v1135
        %vm1146 = vcmp.eq.s32.totalorder %v376, %v1138
        %v1147 = vsel %vm1139, %v675, inf
        %v1148 = vsel %vm1140, %v676, inf
        %v1149 = vsel %vm1141, %v677, inf
        %v1150 = vsel %vm1142, %v678, inf
        %v1151 = vsel %vm1143, %v679, inf
        %v1152 = vsel %vm1144, %v680, inf
        %v1153 = vsel %vm1145, %v681, inf
        %v1154 = vsel %vm1146, %v682, inf
        %1155 = vmin.xlane.f32.xlu0 %v1147
        %v1156 = vpop.xlane.xlu0 %1155
        %1157 = vmin.xlane.f32.xlu0 %v1148
        %v1158 = vpop.xlane.xlu0 %1157
        %1159 = vmin.xlane.f32.xlu0 %v1149
        %v1160 = vpop.xlane.xlu0 %1159
        %1161 = vmin.xlane.f32.xlu0 %v1150
        %v1162 = vpop.xlane.xlu0 %1161
        %1163 = vmin.xlane.f32.xlu0 %v1151
        %v1164 = vpop.xlane.xlu0 %1163
        %1165 = vmin.xlane.f32.xlu0 %v1152
        %v1166 = vpop.xlane.xlu0 %1165
        %1167 = vmin.xlane.f32.xlu0 %v1153
        %v1168 = vpop.xlane.xlu0 %1167
        %1169 = vmin.xlane.f32.xlu0 %v1154
        %v1170 = vpop.xlane.xlu0 %1169
        %v1171 = vmin.f32 %v1107, %v1156
        %v1172 = vmin.f32 %v1108, %v1158
        %v1173 = vmin.f32 %v1109, %v1160
        %v1174 = vmin.f32 %v1110, %v1162
        %v1175 = vmin.f32 %v1111, %v1164
        %v1176 = vmin.f32 %v1112, %v1166
        %v1177 = vmin.f32 %v1113, %v1168
        %v1178 = vmin.f32 %v1114, %v1170
        %1179 = vset.pattern.permute.xlu0 7
        %1180 = vperm.xlu0 %1179, %v343
        %v1181 = vpop.permute.xlu0 %1180
        %1182 = vset.pattern.permute.xlu0 7
        %1183 = vperm.xlu0 %1182, %v344
        %v1184 = vpop.permute.xlu0 %1183
        %1185 = vset.pattern.permute.xlu0 7
        %1186 = vperm.xlu0 %1185, %v345
        %v1187 = vpop.permute.xlu0 %1186
        %1188 = vset.pattern.permute.xlu0 7
        %1189 = vperm.xlu0 %1188, %v346
        %v1190 = vpop.permute.xlu0 %1189
        %1191 = vset.pattern.permute.xlu0 7
        %1192 = vperm.xlu0 %1191, %v347
        %v1193 = vpop.permute.xlu0 %1192
        %1194 = vset.pattern.permute.xlu0 7
        %1195 = vperm.xlu0 %1194, %v348
        %v1196 = vpop.permute.xlu0 %1195
        %1197 = vset.pattern.permute.xlu0 7
        %1198 = vperm.xlu0 %1197, %v349
        %v1199 = vpop.permute.xlu0 %1198
        %1200 = vset.pattern.permute.xlu0 7
        %1201 = vperm.xlu0 %1200, %v350
        %v1202 = vpop.permute.xlu0 %1201
        %vm1203 = vcmp.eq.s32.totalorder %v376, %v1181
        %vm1204 = vcmp.eq.s32.totalorder %v376, %v1184
        %vm1205 = vcmp.eq.s32.totalorder %v376, %v1187
        %vm1206 = vcmp.eq.s32.totalorder %v376, %v1190
        %vm1207 = vcmp.eq.s32.totalorder %v376, %v1193
        %vm1208 = vcmp.eq.s32.totalorder %v376, %v1196
        %vm1209 = vcmp.eq.s32.totalorder %v376, %v1199
        %vm1210 = vcmp.eq.s32.totalorder %v376, %v1202
        %v1211 = vsel %vm1203, %v675, inf
        %v1212 = vsel %vm1204, %v676, inf
        %v1213 = vsel %vm1205, %v677, inf
        %v1214 = vsel %vm1206, %v678, inf
        %v1215 = vsel %vm1207, %v679, inf
        %v1216 = vsel %vm1208, %v680, inf
        %v1217 = vsel %vm1209, %v681, inf
        %v1218 = vsel %vm1210, %v682, inf
        %1219 = vmin.xlane.f32.xlu0 %v1211
        %v1220 = vpop.xlane.xlu0 %1219
        %1221 = vmin.xlane.f32.xlu0 %v1212
        %v1222 = vpop.xlane.xlu0 %1221
        %1223 = vmin.xlane.f32.xlu0 %v1213
        %v1224 = vpop.xlane.xlu0 %1223
        %1225 = vmin.xlane.f32.xlu0 %v1214
        %v1226 = vpop.xlane.xlu0 %1225
        %1227 = vmin.xlane.f32.xlu0 %v1215
        %v1228 = vpop.xlane.xlu0 %1227
        %1229 = vmin.xlane.f32.xlu0 %v1216
        %v1230 = vpop.xlane.xlu0 %1229
        %1231 = vmin.xlane.f32.xlu0 %v1217
        %v1232 = vpop.xlane.xlu0 %1231
        %1233 = vmin.xlane.f32.xlu0 %v1218
        %v1234 = vpop.xlane.xlu0 %1233
        %v1235 = vmin.f32 %v1171, %v1220
        %v1236 = vmin.f32 %v1172, %v1222
        %v1237 = vmin.f32 %v1173, %v1224
        %v1238 = vmin.f32 %v1174, %v1226
        %v1239 = vmin.f32 %v1175, %v1228
        %v1240 = vmin.f32 %v1176, %v1230
        %v1241 = vmin.f32 %v1177, %v1232
        %v1242 = vmin.f32 %v1178, %v1234
        %v1243 = vsub.f32 %v1235, %v724
        %v1244 = vsub.f32 %v1236, %v726
        %v1245 = vsub.f32 %v1237, %v728
        %v1246 = vsub.f32 %v1238, %v730
        %v1247 = vsub.f32 %v1239, %v732
        %v1248 = vsub.f32 %v1240, %v734
        %v1249 = vsub.f32 %v1241, %v736
        %v1250 = vsub.f32 %v1242, %v738
        %v1251 = vsub.f32 %v1243, 0.5
        %v1252 = vsub.f32 %v1244, 0.5
        %v1253 = vsub.f32 %v1245, 0.5
        %v1254 = vsub.f32 %v1246, 0.5
        %v1255 = vsub.f32 %v1247, 0.5
        %v1256 = vsub.f32 %v1248, 0.5
        %v1257 = vsub.f32 %v1249, 0.5
        %v1258 = vsub.f32 %v1250, 0.5
        %v1259 = vand.u32 2147483647, %v1251
        %v1260 = vand.u32 2147483647, %v1252
        %v1261 = vand.u32 2147483647, %v1253
        %v1262 = vand.u32 2147483647, %v1254
        %v1263 = vand.u32 2147483647, %v1255
        %v1264 = vand.u32 2147483647, %v1256
        %v1265 = vand.u32 2147483647, %v1257
        %v1266 = vand.u32 2147483647, %v1258
        %v1267 = vlaneseq
        %v1268 = vshrl.u32 %v1267, 7
        %v1269 = vadd.s32 %v1268, 8
        %v1270 = vadd.s32 %v1268, 16
        %v1271 = vadd.s32 %v1268, 24
        %v1272 = vadd.s32 %v1268, 32
        %v1273 = vadd.s32 %v1268, 40
        %v1274 = vadd.s32 %v1268, 48
        %v1275 = vadd.s32 %v1268, 56
        %v1276 = vstv %s326
        %v1277 = vadd.s32 %v1276, %v1268
        %v1278 = vadd.s32 %v1276, %v1269
        %v1279 = vadd.s32 %v1276, %v1270
        %v1280 = vadd.s32 %v1276, %v1271
        %v1281 = vadd.s32 %v1276, %v1272
        %v1282 = vadd.s32 %v1276, %v1273
        %v1283 = vadd.s32 %v1276, %v1274
        %v1284 = vadd.s32 %v1276, %v1275
        %vm1285 = vcmp.lt.s32.totalorder %v1277, 72
        %vm1286 = vcmp.lt.s32.totalorder %v1278, 72
        %vm1287 = vcmp.lt.s32.totalorder %v1279, 72
        %vm1288 = vcmp.lt.s32.totalorder %v1280, 72
        %vm1289 = vcmp.lt.s32.totalorder %v1281, 72
        %vm1290 = vcmp.lt.s32.totalorder %v1282, 72
        %vm1291 = vcmp.lt.s32.totalorder %v1283, 72
        %vm1292 = vcmp.lt.s32.totalorder %v1284, 72
        %v1293 = vsel %vm1285, %v1259, 0.0
        %v1294 = vsel %vm1286, %v1260, 0.0
        %v1295 = vsel %vm1287, %v1261, 0.0
        %v1296 = vsel %vm1288, %v1262, 0.0
        %v1297 = vsel %vm1289, %v1263, 0.0
        %v1298 = vsel %vm1290, %v1264, 0.0
        %v1299 = vsel %vm1291, %v1265, 0.0
        %v1300 = vsel %vm1292, %v1266, 0.0
        %vm1301 = vcmask 7168
        %v1302 = vsel %vm1301, %v1293, 0.0
        %v1303 = vsel %vm1301, %v1294, 0.0
        %v1304 = vadd.f32 %v1302, %v1303
        %v1305 = vsel %vm1301, %v1295, 0.0
        %v1306 = vadd.f32 %v1304, %v1305
        %v1307 = vsel %vm1301, %v1296, 0.0
        %v1308 = vadd.f32 %v1306, %v1307
        %v1309 = vsel %vm1301, %v1297, 0.0
        %v1310 = vadd.f32 %v1308, %v1309
        %v1311 = vsel %vm1301, %v1298, 0.0
        %v1312 = vadd.f32 %v1310, %v1311
        %v1313 = vsel %vm1301, %v1299, 0.0
        %v1314 = vadd.f32 %v1312, %v1313
        %v1315 = vsel %vm1301, %v1300, 0.0
        %v1316 = vadd.f32 %v1314, %v1315
        %1317 = vadd.xlane.f32.xlu0 %v1316
        %v1318 = vpop.xlane.xlu0 %1317
        %v1319 = vrot.slane %v1318, 4
        %v1320 = vadd.f32 %v1318, %v1319
        %v1321 = vrot.slane %v1320, 2
        %v1322 = vadd.f32 %v1320, %v1321
        %v1323 = vrot.slane %v1322, 1
        %v1324 = vadd.f32 %v1322, %v1323
        %s1325 = vtos %v1324
        %v1326 = vstv %s1325
        %v1327 = vadd.f32 %v1326, 0.0
        %1328 = vst [vmem:[%s302] sm:$0x1] %v1327
        %s1329 = sand.u32 %s189, 1
        %s1330 = scalar_lea.sflag [#allocation3], %s1329
        %s1331 = sand.u32 %s189, 1
        %s1332 = scalar_lea.vmem [#allocation2], %s1331
        // Predicated region
        $region45: #{tpu_custom_call.1} parent=43 // pred_check
          %p1333 = pneg %p199
        $region46: #{tpu_custom_call.1} parent=43 // pred_check_branch
          %1335 = sbr.rel (%p1333) target = $region48
        $region47: #{tpu_custom_call.1} parent=43 // pred_region
          %s1336 = sadd.s32 %s24, %s25
          %s1338 = ssub.s32 16, 16
          %1339 = vsyncadd %s1330, %s1338
          %s1340 = smul.addr %s1336, 16
          %s1341 = scalar_lea.hbm %s6, %s1340
          %s1343 = sshll.u32 %s1332, 4
          %s1344 = int_to_ptr.vmem [resolvable:$true] %s1343
          %1346 = dma.vmem_to_hbm [thread:$0]  %s1344, 16, %s1341, %s1330
        $region48: #{tpu_custom_call.1} parent=43 // pred_fallthru
          _
      $region44: #{tpu_custom_call.1} parent=5 // pred_fallthru
        _
      %p1347 = scmp.le.s32.totalorder 2, %s15
      // Predicated region
      $region49: #{tpu_custom_call.1} parent=5 // pred_check
        %p1348 = pneg %p1347
      $region50: #{tpu_custom_call.1} parent=5 // pred_check_branch
        %1350 = sbr.rel (%p1348) target = $region52
      $region51: #{tpu_custom_call.1} parent=5 // pred_region
        %s1351 = ssub.s32 %s15, 2
        // Predicated region
        $region53: #{tpu_custom_call.1} parent=51 // pred_check
          %p1352 = pneg %p205
        $region54: #{tpu_custom_call.1} parent=51 // pred_check_branch
          %1354 = sbr.rel (%p1352) target = $region56
        $region55: #{tpu_custom_call.1} parent=51 // pred_region
          %s1355 = sand.u32 %s190, 1
          %s1356 = scalar_lea.sflag [#allocation3], %s1355
          %s1357 = sand.u32 %s190, 1
          %s1358 = scalar_lea.vmem [#allocation2], %s1357
          %1359 = dma.done %s1356, 16
        $region56: #{tpu_custom_call.1} parent=51 // pred_fallthru
          _
      $region52: #{tpu_custom_call.1} parent=5 // pred_fallthru
        _
    $region6: #{tpu_custom_call.1} parent=1 // loop_footer
      %s19 = sadd.s32 1, %s15
    $region7: #{tpu_custom_call.1} parent=1 // loop_footer_branch
      %14 = sbr.rel target = $region3
    $region8: #{tpu_custom_call.1} parent=1 // loop_exit
      _
    %1360 = vsyncpa [#allocation3], 1
    %s1361 = scalar_lea.sflag [#allocation3], 1
    %1362 = vsyncpa %s1361, 1

</llo_original>
